<compile_context>
chip_gen: v5e
topology: v5e:2x2
jax: 0.10.0
libtpu: 0.0.40
codegen_flags: <defaults>
</compile_context>

<pallas_src>
import jax
import jax.numpy as jnp
from jax.experimental import pallas as pl
from jax.experimental.pallas import tpu as pltpu

EPS = 1e-5


def _fused_kernel(x_ref, w_ref, gamma_ref, beta_ref, o_ref):
    # x_ref:     [Cin, M]   f32            (full x, M = N*H*W)
    # w_ref:     [Ct, Cin]  bf16 (or fp8)  (Cout tile of the 1x1 conv weight)
    # gamma_ref: [Ct, 1]    f32
    # beta_ref:  [Ct, 1]    f32
    # o_ref:     [Ct, M]    f32
    x = jnp.maximum(x_ref[...], 0.0).astype(jnp.bfloat16)   # ReLU (relu130), bf16 MXU path
    w = w_ref[...].astype(jnp.bfloat16)                      # no-op for bf16 weights
    y = jnp.dot(w, x, preferred_element_type=jnp.float32)    # 1x1 conv == W @ x, f32 accum

    # Training-mode BatchNorm2d: biased batch stats over the M columns.
    # Centered (two-pass) variance -> no E[y^2]-E[y]^2 cancellation.
    inv_m = 1.0 / y.shape[1]                                 # static
    mean = jnp.sum(y, axis=1, keepdims=True) * inv_m
    yc = y - mean
    var = jnp.sum(yc * yc, axis=1, keepdims=True) * inv_m
    scale = gamma_ref[...] * jax.lax.rsqrt(var + EPS)        # gamma folded into inv_std
    o_ref[...] = jnp.maximum(yc * scale + beta_ref[...], 0.0)  # affine + ReLU (relu131)


def _n_cout_tiles(cout):
    """2 tiles only on chips with 2 TensorCores per device (v7x); else 1."""
    try:
        kind = jax.devices()[0].device_kind.lower()
    except Exception:
        kind = ""
    if "v7" in kind and cout % 16 == 0:
        return 2
    return 1


@jax.jit
def fused_relu_conv_bn_relu(x_nchw, w, gamma, beta):
    """x_nchw: [N, Cin, H, W]; w: [Cout, Cin] (1x1 conv weight squeezed, ideally
    stored bf16; fp8-e4m3 with per-channel scaling is acceptable on v7x since
    BN absorbs the scale); gamma, beta: [Cout]. Returns [N, Cout, H, W]."""
    N, Cin, H, W = x_nchw.shape
    Cout = w.shape[0]
    M = N * H * W

    # NCHW -> [Cin, M]. For N == 1 this is a pure reshape (no transpose/copy).
    if N == 1:
        x_mat = x_nchw.reshape(Cin, M)
    else:
        x_mat = jnp.transpose(x_nchw, (1, 0, 2, 3)).reshape(Cin, M)

    if w.dtype == jnp.float32:
        w = w.astype(jnp.bfloat16)          # no-op if already stored narrow
    gamma2 = gamma.reshape(Cout, 1).astype(jnp.float32)
    beta2 = beta.reshape(Cout, 1).astype(jnp.float32)

    n_tiles = _n_cout_tiles(Cout)           # 1 on v5e/v6e, 2 on v7x
    ct = Cout // n_tiles

    w_bytes = Cout * Cin * jnp.dtype(w.dtype).itemsize
    cost = pl.CostEstimate(
        flops=2 * Cout * Cin * M,                                  # ~28 MFLOP
        transcendentals=Cout,                                      # rsqrt per channel
        bytes_accessed=Cin * M * 4 + w_bytes + 2 * Cout * 4 + Cout * M * 4,
    )

    out_t = pl.pallas_call(
        _fused_kernel,
        out_shape=jax.ShapeDtypeStruct((Cout, M), jnp.float32),
        grid=(n_tiles,),
        in_specs=[
            pl.BlockSpec((Cin, M), lambda j: (0, 0)),     # full x; constant block idx -> no re-DMA
            pl.BlockSpec((ct, Cin), lambda j: (j, 0)),    # Cout tile of W
            pl.BlockSpec((ct, 1), lambda j: (j, 0)),      # gamma tile
            pl.BlockSpec((ct, 1), lambda j: (j, 0)),      # beta tile
        ],
        out_specs=pl.BlockSpec((ct, M), lambda j: (j, 0)),
        compiler_params=pltpu.CompilerParams(
            dimension_semantics=("parallel",)),
        cost_estimate=cost,
    )(x_mat, w, gamma2, beta2)

    # [Cout, M] -> NCHW. For N == 1 this is again a pure reshape.
    if N == 1:
        return out_t.reshape(1, Cout, H, W)
    return jnp.transpose(out_t.reshape(Cout, N, H, W), (1, 0, 2, 3))


def _reference(x_nchw, w, gamma, beta):
    """Pure-JAX f32 reference with the module's exact semantics."""
    x = jnp.maximum(x_nchw, 0.0)
    y = jnp.einsum("nchw,oc->nohw", x, w)
    mean = jnp.mean(y, axis=(0, 2, 3), keepdims=True)
    var = jnp.mean((y - mean) ** 2, axis=(0, 2, 3), keepdims=True)
    y = (y - mean) * jax.lax.rsqrt(var + EPS)
    y = y * gamma.reshape(1, -1, 1, 1) + beta.reshape(1, -1, 1, 1)
    return jnp.maximum(y, 0.0)


def _reference_bf16_quantized(x_nchw, w, gamma, beta):
    """Reference applying the same deliberate bf16 quantization as the kernel
    (weight and post-ReLU activation rounded to bf16, math in f32)."""
    xq = jnp.maximum(x_nchw, 0.0).astype(jnp.bfloat16).astype(jnp.float32)
    wq = w.astype(jnp.bfloat16).astype(jnp.float32)
    y = jnp.einsum("nchw,oc->nohw", xq, wq)
    mean = jnp.mean(y, axis=(0, 2, 3), keepdims=True)
    var = jnp.mean((y - mean) ** 2, axis=(0, 2, 3), keepdims=True)
    y = (y - mean) * jax.lax.rsqrt(var + EPS)
    y = y * gamma.reshape(1, -1, 1, 1) + beta.reshape(1, -1, 1, 1)
    return jnp.maximum(y, 0.0)


if __name__ == "__main__":
    key = jax.random.PRNGKey(0)
    k_x, k_w, k_g, k_b = jax.random.split(key, 4)

    # Shapes from the PyTorch module: x462 = [1, 1488, 7, 7], Conv2d(1488 -> 192, 1x1).
    N, Cin, H, W = 1, 1488, 7, 7
    Cout = 192

    x = jax.random.normal(k_x, (N, Cin, H, W), dtype=jnp.float32)
    w_f32 = jax.random.normal(k_w, (Cout, Cin), dtype=jnp.float32) * 0.02
    gamma = 1.0 + 0.1 * jax.random.normal(k_g, (Cout,), dtype=jnp.float32)
    beta = 0.1 * jax.random.normal(k_b, (Cout,), dtype=jnp.float32)

    # Store the conv weight as bf16 (the deliberate perf tradeoff: halves the
    # dominant HBM weight DMA; accumulation stays f32).
    w_param = w_f32.astype(jnp.bfloat16)

    out = fused_relu_conv_bn_relu(x, w_param, gamma, beta)
    out = jax.block_until_ready(out)
    assert out.shape == (N, Cout, H, W)

    # Tight check vs a reference with identical bf16 quantization (kernel exactness).
    ref_q = _reference_bf16_quantized(x, w_f32, gamma, beta)
    assert jnp.allclose(out, ref_q, atol=2e-3, rtol=2e-3)

    # Loose check vs the pure-f32 PyTorch semantics; the gap is solely the
    # deliberate bf16 weight/activation rounding in the MXU path.
    ref_f32 = _reference(x, w_f32, gamma, beta)
    assert jnp.allclose(out, ref_f32, atol=2e-2, rtol=2e-2)

    print("KERNEL_OK")
</pallas_src>

<mosaic_0001>
module attributes {stable_mosaic.version = 11 : i64} {
  func.func @_fused_kernel(%arg0: i32, %arg1: memref<1488x49xf32, #tpu.memory_space<vmem>>, %arg2: memref<192x1488xbf16, #tpu.memory_space<vmem>>, %arg3: memref<192x1xf32, #tpu.memory_space<vmem>>, %arg4: memref<192x1xf32, #tpu.memory_space<vmem>>, %arg5: memref<192x49xf32, #tpu.memory_space<vmem>>) attributes {dimension_semantics = [#tpu.dimension_semantics<parallel>], iteration_bounds = array<i64: 1>, scalar_prefetch = 0 : i64, scratch_operands = 0 : i64, tpu.core_type = #tpu.core_type<tc>, window_params = [{pipeline_mode = #tpu.pipeline_mode<synchronous>, transform_indices = @transform_0, window_bounds = array<i64: 1488, 49>}, {transform_indices = @transform_1, window_bounds = array<i64: 192, 1488>}, {transform_indices = @transform_2, window_bounds = array<i64: 192, 1>}, {transform_indices = @transform_3, window_bounds = array<i64: 192, 1>}, {transform_indices = @transform_4, window_bounds = array<i64: 192, 49>}]} {
    %c0 = arith.constant 0 : index
    %c0_0 = arith.constant 0 : index
    %0 = vector.load %arg1[%c0, %c0_0] : memref<1488x49xf32, #tpu.memory_space<vmem>>, vector<1488x49xf32>
    %cst = arith.constant 0.000000e+00 : f32
    %1 = vector.broadcast %cst : f32 to vector<1488x49xf32>
    %2 = arith.maximumf %0, %1 : vector<1488x49xf32>
    %3 = arith.truncf %2 : vector<1488x49xf32> to vector<1488x49xbf16>
    %c0_1 = arith.constant 0 : index
    %c0_2 = arith.constant 0 : index
    %4 = vector.load %arg2[%c0_1, %c0_2] : memref<192x1488xbf16, #tpu.memory_space<vmem>>, vector<192x1488xbf16>
    %cst_3 = arith.constant dense<0.000000e+00> : vector<192x49xf32>
    %5 = tpu.matmul %4, %3, %cst_3 {dimension_numbers = #tpu.dot_dimension_numbers<[1], [0], [0], [1], [0, 0, 1, 1], [], []>} : vector<192x1488xbf16>, vector<1488x49xbf16>, vector<192x49xf32> -> vector<192x49xf32>
    %cst_4 = arith.constant dense<0.000000e+00> : vector<192xf32>
    %6 = vector.multi_reduction <add>, %5, %cst_4 [1] : vector<192x49xf32> to vector<192xf32>
    %7 = vector.shape_cast %6 : vector<192xf32> to vector<192x1xf32>
    %cst_5 = arith.constant 0.0204081628 : f32
    %8 = vector.broadcast %cst_5 : f32 to vector<192x1xf32>
    %9 = arith.mulf %7, %8 : vector<192x1xf32>
    %10 = vector.broadcast %9 : vector<192x1xf32> to vector<192x49xf32>
    %11 = arith.subf %5, %10 : vector<192x49xf32>
    %12 = arith.mulf %11, %11 : vector<192x49xf32>
    %cst_6 = arith.constant dense<0.000000e+00> : vector<192xf32>
    %13 = vector.multi_reduction <add>, %12, %cst_6 [1] : vector<192x49xf32> to vector<192xf32>
    %14 = vector.shape_cast %13 : vector<192xf32> to vector<192x1xf32>
    %cst_7 = arith.constant 0.0204081628 : f32
    %15 = vector.broadcast %cst_7 : f32 to vector<192x1xf32>
    %16 = arith.mulf %14, %15 : vector<192x1xf32>
    %c0_8 = arith.constant 0 : index
    %c0_9 = arith.constant 0 : index
    %17 = vector.load %arg3[%c0_8, %c0_9] : memref<192x1xf32, #tpu.memory_space<vmem>>, vector<192x1xf32>
    %cst_10 = arith.constant 9.99999974E-6 : f32
    %18 = vector.broadcast %cst_10 : f32 to vector<192x1xf32>
    %19 = arith.addf %16, %18 : vector<192x1xf32>
    %20 = math.rsqrt %19 : vector<192x1xf32>
    %21 = arith.mulf %17, %20 : vector<192x1xf32>
    %22 = vector.broadcast %21 : vector<192x1xf32> to vector<192x49xf32>
    %23 = arith.mulf %11, %22 : vector<192x49xf32>
    %c0_11 = arith.constant 0 : index
    %c0_12 = arith.constant 0 : index
    %24 = vector.load %arg4[%c0_11, %c0_12] : memref<192x1xf32, #tpu.memory_space<vmem>>, vector<192x1xf32>
    %25 = vector.broadcast %24 : vector<192x1xf32> to vector<192x49xf32>
    %26 = arith.addf %23, %25 : vector<192x49xf32>
    %cst_13 = arith.constant 0.000000e+00 : f32
    %27 = vector.broadcast %cst_13 : f32 to vector<192x49xf32>
    %28 = arith.maximumf %26, %27 : vector<192x49xf32>
    %c0_14 = arith.constant 0 : index
    %c0_15 = arith.constant 0 : index
    %29 = vector.load %arg5[%c0_14, %c0_15] : memref<192x49xf32, #tpu.memory_space<vmem>>, vector<192x49xf32>
    tpu.vector_store %arg5[%c0_14, %c0_15], %28 {strides = array<i32>} : memref<192x49xf32, #tpu.memory_space<vmem>>, vector<192x49xf32>,
    return
  }
  func.func @transform_0(%arg0: i32) -> (i32, i32) {
    %c0_i32 = arith.constant 0 : i32
    %c0_i32_0 = arith.constant 0 : i32
    %c0_i32_1 = arith.constant 0 : i32
    return %c0_i32, %c0_i32_0 : i32, i32
  }
  func.func @transform_1(%arg0: i32) -> (i32, i32) {
    %c0_i32 = arith.constant 0 : i32
    %c0_i32_0 = arith.constant 0 : i32
    return %arg0, %c0_i32 : i32, i32
  }
  func.func @transform_2(%arg0: i32) -> (i32, i32) {
    %c0_i32 = arith.constant 0 : i32
    %c0_i32_0 = arith.constant 0 : i32
    return %arg0, %c0_i32 : i32, i32
  }
  func.func @transform_3(%arg0: i32) -> (i32, i32) {
    %c0_i32 = arith.constant 0 : i32
    %c0_i32_0 = arith.constant 0 : i32
    return %arg0, %c0_i32 : i32, i32
  }
  func.func @transform_4(%arg0: i32) -> (i32, i32) {
    %c0_i32 = arith.constant 0 : i32
    %c0_i32_0 = arith.constant 0 : i32
    return %arg0, %c0_i32 : i32, i32
  }
}

</mosaic_0001>

<llo_original>
// kernel: fused_relu_conv_bn_relu.1
$region0: #{fused_relu_conv_bn_relu.1}
  #allocation0 [shape = 'u32[]', space=smem, size = 0x4, offset = 0x4, fixed_abs, tag = 'smem constant byte address 0x4 - core index']
  #allocation1 [shape = 'u32[72,128]{1,0:T(1,128)}', space=vmem, size = 0x9000, scoped, tag = 'internal scratch']
  %s0 = inlined_call_operand.vmem [shape: f32[1488,49], index: 0, kind: input, shape index: {}]
  %s1 = inlined_call_operand.vmem [shape: bf16[192,1488], index: 1, kind: input, shape index: {}]
  %s2 = inlined_call_operand.vmem [shape: f32[192,1], index: 2, kind: input, shape index: {}]
  %s3 = inlined_call_operand.vmem [shape: f32[192,1], index: 3, kind: input, shape index: {}]
  %s4 = inlined_call_operand.vmem [shape: f32[192,49], index: 4, kind: output, shape index: {}]
  %s5 = sld [smem:[#allocation0]]
  $region26: #{fused_relu_conv_bn_relu.1} parent=0
    _
  %s7 = ssub.s32 1, %s5
  %s8 = scalar_select 0, %s7, %s5
  // Predicated region
  $region2: #{fused_relu_conv_bn_relu.1} parent=0 // pred_check
    _
  $region3: #{fused_relu_conv_bn_relu.1} parent=0 // pred_check_branch
    %10 = sbr.rel (0) target = $region5
  $region4: #{fused_relu_conv_bn_relu.1} parent=0 // pred_region
    _
  $region5: #{fused_relu_conv_bn_relu.1} parent=0 // pred_fallthru
    _
  // Predicated region
  $region6: #{fused_relu_conv_bn_relu.1} parent=0 // pred_check
    _
  $region7: #{fused_relu_conv_bn_relu.1} parent=0 // pred_check_branch
    %12 = sbr.rel (0) target = $region9
  $region8: #{fused_relu_conv_bn_relu.1} parent=0 // pred_region
    _
  $region9: #{fused_relu_conv_bn_relu.1} parent=0 // pred_fallthru
    _
  // Predicated region
  $region10: #{fused_relu_conv_bn_relu.1} parent=0 // pred_check
    _
  $region11: #{fused_relu_conv_bn_relu.1} parent=0 // pred_check_branch
    %14 = sbr.rel (0) target = $region13
  $region12: #{fused_relu_conv_bn_relu.1} parent=0 // pred_region
    _
  $region13: #{fused_relu_conv_bn_relu.1} parent=0 // pred_fallthru
    _
  // Predicated region
  $region14: #{fused_relu_conv_bn_relu.1} parent=0 // pred_check
    _
  $region15: #{fused_relu_conv_bn_relu.1} parent=0 // pred_check_branch
    %16 = sbr.rel (0) target = $region17
  $region16: #{fused_relu_conv_bn_relu.1} parent=0 // pred_region
    _
  $region17: #{fused_relu_conv_bn_relu.1} parent=0 // pred_fallthru
    _
  %v18 = vld [vmem:[%s0] sm:$0xff]
  %v19 = vld [vmem:[%s0 + $0x8] sm:$0xff]
  %v20 = vld [vmem:[%s0 + $0x10] sm:$0xff]
  %v21 = vld [vmem:[%s0 + $0x18] sm:$0xff]
  %v22 = vld [vmem:[%s0 + $0x20] sm:$0xff]
  %v23 = vld [vmem:[%s0 + $0x28] sm:$0xff]
  %v24 = vld [vmem:[%s0 + $0x30] sm:$0xff]
  %v25 = vld [vmem:[%s0 + $0x38] sm:$0xff]
  %v26 = vld [vmem:[%s0 + $0x40] sm:$0xff]
  %v27 = vld [vmem:[%s0 + $0x48] sm:$0xff]
  %v28 = vld [vmem:[%s0 + $0x50] sm:$0xff]
  %v29 = vld [vmem:[%s0 + $0x58] sm:$0xff]
  %v30 = vld [vmem:[%s0 + $0x60] sm:$0xff]
  %v31 = vld [vmem:[%s0 + $0x68] sm:$0xff]
  %v32 = vld [vmem:[%s0 + $0x70] sm:$0xff]
  %v33 = vld [vmem:[%s0 + $0x78] sm:$0xff]
  %v34 = vld [vmem:[%s0 + $0x80] sm:$0xff]
  %v35 = vld [vmem:[%s0 + $0x88] sm:$0xff]
  %v36 = vld [vmem:[%s0 + $0x90] sm:$0xff]
  %v37 = vld [vmem:[%s0 + $0x98] sm:$0xff]
  %v38 = vld [vmem:[%s0 + $0xa0] sm:$0xff]
  %v39 = vld [vmem:[%s0 + $0xa8] sm:$0xff]
  %v40 = vld [vmem:[%s0 + $0xb0] sm:$0xff]
  %v41 = vld [vmem:[%s0 + $0xb8] sm:$0xff]
  %v42 = vld [vmem:[%s0 + $0xc0] sm:$0xff]
  %v43 = vld [vmem:[%s0 + $0xc8] sm:$0xff]
  %v44 = vld [vmem:[%s0 + $0xd0] sm:$0xff]
  %v45 = vld [vmem:[%s0 + $0xd8] sm:$0xff]
  %v46 = vld [vmem:[%s0 + $0xe0] sm:$0xff]
  %v47 = vld [vmem:[%s0 + $0xe8] sm:$0xff]
  %v48 = vld [vmem:[%s0 + $0xf0] sm:$0xff]
  %v49 = vld [vmem:[%s0 + $0xf8] sm:$0xff]
  %v50 = vld [vmem:[%s0 + $0x100] sm:$0xff]
  %v51 = vld [vmem:[%s0 + $0x108] sm:$0xff]
  %v52 = vld [vmem:[%s0 + $0x110] sm:$0xff]
  %v53 = vld [vmem:[%s0 + $0x118] sm:$0xff]
  %v54 = vld [vmem:[%s0 + $0x120] sm:$0xff]
  %v55 = vld [vmem:[%s0 + $0x128] sm:$0xff]
  %v56 = vld [vmem:[%s0 + $0x130] sm:$0xff]
  %v57 = vld [vmem:[%s0 + $0x138] sm:$0xff]
  %v58 = vld [vmem:[%s0 + $0x140] sm:$0xff]
  %v59 = vld [vmem:[%s0 + $0x148] sm:$0xff]
  %v60 = vld [vmem:[%s0 + $0x150] sm:$0xff]
  %v61 = vld [vmem:[%s0 + $0x158] sm:$0xff]
  %v62 = vld [vmem:[%s0 + $0x160] sm:$0xff]
  %v63 = vld [vmem:[%s0 + $0x168] sm:$0xff]
  %v64 = vld [vmem:[%s0 + $0x170] sm:$0xff]
  %v65 = vld [vmem:[%s0 + $0x178] sm:$0xff]
  %v66 = vld [vmem:[%s0 + $0x180] sm:$0xff]
  %v67 = vld [vmem:[%s0 + $0x188] sm:$0xff]
  %v68 = vld [vmem:[%s0 + $0x190] sm:$0xff]
  %v69 = vld [vmem:[%s0 + $0x198] sm:$0xff]
  %v70 = vld [vmem:[%s0 + $0x1a0] sm:$0xff]
  %v71 = vld [vmem:[%s0 + $0x1a8] sm:$0xff]
  %v72 = vld [vmem:[%s0 + $0x1b0] sm:$0xff]
  %v73 = vld [vmem:[%s0 + $0x1b8] sm:$0xff]
  %v74 = vld [vmem:[%s0 + $0x1c0] sm:$0xff]
  %v75 = vld [vmem:[%s0 + $0x1c8] sm:$0xff]
  %v76 = vld [vmem:[%s0 + $0x1d0] sm:$0xff]
  %v77 = vld [vmem:[%s0 + $0x1d8] sm:$0xff]
  %v78 = vld [vmem:[%s0 + $0x1e0] sm:$0xff]
  %v79 = vld [vmem:[%s0 + $0x1e8] sm:$0xff]
  %v80 = vld [vmem:[%s0 + $0x1f0] sm:$0xff]
  %v81 = vld [vmem:[%s0 + $0x1f8] sm:$0xff]
  %v82 = vld [vmem:[%s0 + $0x200] sm:$0xff]
  %v83 = vld [vmem:[%s0 + $0x208] sm:$0xff]
  %v84 = vld [vmem:[%s0 + $0x210] sm:$0xff]
  %v85 = vld [vmem:[%s0 + $0x218] sm:$0xff]
  %v86 = vld [vmem:[%s0 + $0x220] sm:$0xff]
  %v87 = vld [vmem:[%s0 + $0x228] sm:$0xff]
  %v88 = vld [vmem:[%s0 + $0x230] sm:$0xff]
  %v89 = vld [vmem:[%s0 + $0x238] sm:$0xff]
  %v90 = vld [vmem:[%s0 + $0x240] sm:$0xff]
  %v91 = vld [vmem:[%s0 + $0x248] sm:$0xff]
  %v92 = vld [vmem:[%s0 + $0x250] sm:$0xff]
  %v93 = vld [vmem:[%s0 + $0x258] sm:$0xff]
  %v94 = vld [vmem:[%s0 + $0x260] sm:$0xff]
  %v95 = vld [vmem:[%s0 + $0x268] sm:$0xff]
  %v96 = vld [vmem:[%s0 + $0x270] sm:$0xff]
  %v97 = vld [vmem:[%s0 + $0x278] sm:$0xff]
  %v98 = vld [vmem:[%s0 + $0x280] sm:$0xff]
  %v99 = vld [vmem:[%s0 + $0x288] sm:$0xff]
  %v100 = vld [vmem:[%s0 + $0x290] sm:$0xff]
  %v101 = vld [vmem:[%s0 + $0x298] sm:$0xff]
  %v102 = vld [vmem:[%s0 + $0x2a0] sm:$0xff]
  %v103 = vld [vmem:[%s0 + $0x2a8] sm:$0xff]
  %v104 = vld [vmem:[%s0 + $0x2b0] sm:$0xff]
  %v105 = vld [vmem:[%s0 + $0x2b8] sm:$0xff]
  %v106 = vld [vmem:[%s0 + $0x2c0] sm:$0xff]
  %v107 = vld [vmem:[%s0 + $0x2c8] sm:$0xff]
  %v108 = vld [vmem:[%s0 + $0x2d0] sm:$0xff]
  %v109 = vld [vmem:[%s0 + $0x2d8] sm:$0xff]
  %v110 = vld [vmem:[%s0 + $0x2e0] sm:$0xff]
  %v111 = vld [vmem:[%s0 + $0x2e8] sm:$0xff]
  %v112 = vld [vmem:[%s0 + $0x2f0] sm:$0xff]
  %v113 = vld [vmem:[%s0 + $0x2f8] sm:$0xff]
  %v114 = vld [vmem:[%s0 + $0x300] sm:$0xff]
  %v115 = vld [vmem:[%s0 + $0x308] sm:$0xff]
  %v116 = vld [vmem:[%s0 + $0x310] sm:$0xff]
  %v117 = vld [vmem:[%s0 + $0x318] sm:$0xff]
  %v118 = vld [vmem:[%s0 + $0x320] sm:$0xff]
  %v119 = vld [vmem:[%s0 + $0x328] sm:$0xff]
  %v120 = vld [vmem:[%s0 + $0x330] sm:$0xff]
  %v121 = vld [vmem:[%s0 + $0x338] sm:$0xff]
  %v122 = vld [vmem:[%s0 + $0x340] sm:$0xff]
  %v123 = vld [vmem:[%s0 + $0x348] sm:$0xff]
  %v124 = vld [vmem:[%s0 + $0x350] sm:$0xff]
  %v125 = vld [vmem:[%s0 + $0x358] sm:$0xff]
  %v126 = vld [vmem:[%s0 + $0x360] sm:$0xff]
  %v127 = vld [vmem:[%s0 + $0x368] sm:$0xff]
  %v128 = vld [vmem:[%s0 + $0x370] sm:$0xff]
  %v129 = vld [vmem:[%s0 + $0x378] sm:$0xff]
  %v130 = vld [vmem:[%s0 + $0x380] sm:$0xff]
  %v131 = vld [vmem:[%s0 + $0x388] sm:$0xff]
  %v132 = vld [vmem:[%s0 + $0x390] sm:$0xff]
  %v133 = vld [vmem:[%s0 + $0x398] sm:$0xff]
  %v134 = vld [vmem:[%s0 + $0x3a0] sm:$0xff]
  %v135 = vld [vmem:[%s0 + $0x3a8] sm:$0xff]
  %v136 = vld [vmem:[%s0 + $0x3b0] sm:$0xff]
  %v137 = vld [vmem:[%s0 + $0x3b8] sm:$0xff]
  %v138 = vld [vmem:[%s0 + $0x3c0] sm:$0xff]
  %v139 = vld [vmem:[%s0 + $0x3c8] sm:$0xff]
  %v140 = vld [vmem:[%s0 + $0x3d0] sm:$0xff]
  %v141 = vld [vmem:[%s0 + $0x3d8] sm:$0xff]
  %v142 = vld [vmem:[%s0 + $0x3e0] sm:$0xff]
  %v143 = vld [vmem:[%s0 + $0x3e8] sm:$0xff]
  %v144 = vld [vmem:[%s0 + $0x3f0] sm:$0xff]
  %v145 = vld [vmem:[%s0 + $0x3f8] sm:$0xff]
  %v146 = vld [vmem:[%s0 + $0x400] sm:$0xff]
  %v147 = vld [vmem:[%s0 + $0x408] sm:$0xff]
  %v148 = vld [vmem:[%s0 + $0x410] sm:$0xff]
  %v149 = vld [vmem:[%s0 + $0x418] sm:$0xff]
  %v150 = vld [vmem:[%s0 + $0x420] sm:$0xff]
  %v151 = vld [vmem:[%s0 + $0x428] sm:$0xff]
  %v152 = vld [vmem:[%s0 + $0x430] sm:$0xff]
  %v153 = vld [vmem:[%s0 + $0x438] sm:$0xff]
  %v154 = vld [vmem:[%s0 + $0x440] sm:$0xff]
  %v155 = vld [vmem:[%s0 + $0x448] sm:$0xff]
  %v156 = vld [vmem:[%s0 + $0x450] sm:$0xff]
  %v157 = vld [vmem:[%s0 + $0x458] sm:$0xff]
  %v158 = vld [vmem:[%s0 + $0x460] sm:$0xff]
  %v159 = vld [vmem:[%s0 + $0x468] sm:$0xff]
  %v160 = vld [vmem:[%s0 + $0x470] sm:$0xff]
  %v161 = vld [vmem:[%s0 + $0x478] sm:$0xff]
  %v162 = vld [vmem:[%s0 + $0x480] sm:$0xff]
  %v163 = vld [vmem:[%s0 + $0x488] sm:$0xff]
  %v164 = vld [vmem:[%s0 + $0x490] sm:$0xff]
  %v165 = vld [vmem:[%s0 + $0x498] sm:$0xff]
  %v166 = vld [vmem:[%s0 + $0x4a0] sm:$0xff]
  %v167 = vld [vmem:[%s0 + $0x4a8] sm:$0xff]
  %v168 = vld [vmem:[%s0 + $0x4b0] sm:$0xff]
  %v169 = vld [vmem:[%s0 + $0x4b8] sm:$0xff]
  %v170 = vld [vmem:[%s0 + $0x4c0] sm:$0xff]
  %v171 = vld [vmem:[%s0 + $0x4c8] sm:$0xff]
  %v172 = vld [vmem:[%s0 + $0x4d0] sm:$0xff]
  %v173 = vld [vmem:[%s0 + $0x4d8] sm:$0xff]
  %v174 = vld [vmem:[%s0 + $0x4e0] sm:$0xff]
  %v175 = vld [vmem:[%s0 + $0x4e8] sm:$0xff]
  %v176 = vld [vmem:[%s0 + $0x4f0] sm:$0xff]
  %v177 = vld [vmem:[%s0 + $0x4f8] sm:$0xff]
  %v178 = vld [vmem:[%s0 + $0x500] sm:$0xff]
  %v179 = vld [vmem:[%s0 + $0x508] sm:$0xff]
  %v180 = vld [vmem:[%s0 + $0x510] sm:$0xff]
  %v181 = vld [vmem:[%s0 + $0x518] sm:$0xff]
  %v182 = vld [vmem:[%s0 + $0x520] sm:$0xff]
  %v183 = vld [vmem:[%s0 + $0x528] sm:$0xff]
  %v184 = vld [vmem:[%s0 + $0x530] sm:$0xff]
  %v185 = vld [vmem:[%s0 + $0x538] sm:$0xff]
  %v186 = vld [vmem:[%s0 + $0x540] sm:$0xff]
  %v187 = vld [vmem:[%s0 + $0x548] sm:$0xff]
  %v188 = vld [vmem:[%s0 + $0x550] sm:$0xff]
  %v189 = vld [vmem:[%s0 + $0x558] sm:$0xff]
  %v190 = vld [vmem:[%s0 + $0x560] sm:$0xff]
  %v191 = vld [vmem:[%s0 + $0x568] sm:$0xff]
  %v192 = vld [vmem:[%s0 + $0x570] sm:$0xff]
  %v193 = vld [vmem:[%s0 + $0x578] sm:$0xff]
  %v194 = vld [vmem:[%s0 + $0x580] sm:$0xff]
  %v195 = vld [vmem:[%s0 + $0x588] sm:$0xff]
  %v196 = vld [vmem:[%s0 + $0x590] sm:$0xff]
  %v197 = vld [vmem:[%s0 + $0x598] sm:$0xff]
  %v198 = vld [vmem:[%s0 + $0x5a0] sm:$0xff]
  %v199 = vld [vmem:[%s0 + $0x5a8] sm:$0xff]
  %v200 = vld [vmem:[%s0 + $0x5b0] sm:$0xff]
  %v201 = vld [vmem:[%s0 + $0x5b8] sm:$0xff]
  %v202 = vld [vmem:[%s0 + $0x5c0] sm:$0xff]
  %v203 = vld [vmem:[%s0 + $0x5c8] sm:$0xff]
  %v204 = vmax.f32 %v18, 0.0
  %v205 = vmax.f32 %v19, 0.0
  %v206 = vmax.f32 %v20, 0.0
  %v207 = vmax.f32 %v21, 0.0
  %v208 = vmax.f32 %v22, 0.0
  %v209 = vmax.f32 %v23, 0.0
  %v210 = vmax.f32 %v24, 0.0
  %v211 = vmax.f32 %v25, 0.0
  %v212 = vmax.f32 %v26, 0.0
  %v213 = vmax.f32 %v27, 0.0
  %v214 = vmax.f32 %v28, 0.0
  %v215 = vmax.f32 %v29, 0.0
  %v216 = vmax.f32 %v30, 0.0
  %v217 = vmax.f32 %v31, 0.0
  %v218 = vmax.f32 %v32, 0.0
  %v219 = vmax.f32 %v33, 0.0
  %v220 = vmax.f32 %v34, 0.0
  %v221 = vmax.f32 %v35, 0.0
  %v222 = vmax.f32 %v36, 0.0
  %v223 = vmax.f32 %v37, 0.0
  %v224 = vmax.f32 %v38, 0.0
  %v225 = vmax.f32 %v39, 0.0
  %v226 = vmax.f32 %v40, 0.0
  %v227 = vmax.f32 %v41, 0.0
  %v228 = vmax.f32 %v42, 0.0
  %v229 = vmax.f32 %v43, 0.0
  %v230 = vmax.f32 %v44, 0.0
  %v231 = vmax.f32 %v45, 0.0
  %v232 = vmax.f32 %v46, 0.0
  %v233 = vmax.f32 %v47, 0.0
  %v234 = vmax.f32 %v48, 0.0
  %v235 = vmax.f32 %v49, 0.0
  %v236 = vmax.f32 %v50, 0.0
  %v237 = vmax.f32 %v51, 0.0
  %v238 = vmax.f32 %v52, 0.0
  %v239 = vmax.f32 %v53, 0.0
  %v240 = vmax.f32 %v54, 0.0
  %v241 = vmax.f32 %v55, 0.0
  %v242 = vmax.f32 %v56, 0.0
  %v243 = vmax.f32 %v57, 0.0
  %v244 = vmax.f32 %v58, 0.0
  %v245 = vmax.f32 %v59, 0.0
  %v246 = vmax.f32 %v60, 0.0
  %v247 = vmax.f32 %v61, 0.0
  %v248 = vmax.f32 %v62, 0.0
  %v249 = vmax.f32 %v63, 0.0
  %v250 = vmax.f32 %v64, 0.0
  %v251 = vmax.f32 %v65, 0.0
  %v252 = vmax.f32 %v66, 0.0
  %v253 = vmax.f32 %v67, 0.0
  %v254 = vmax.f32 %v68, 0.0
  %v255 = vmax.f32 %v69, 0.0
  %v256 = vmax.f32 %v70, 0.0
  %v257 = vmax.f32 %v71, 0.0
  %v258 = vmax.f32 %v72, 0.0
  %v259 = vmax.f32 %v73, 0.0
  %v260 = vmax.f32 %v74, 0.0
  %v261 = vmax.f32 %v75, 0.0
  %v262 = vmax.f32 %v76, 0.0
  %v263 = vmax.f32 %v77, 0.0
  %v264 = vmax.f32 %v78, 0.0
  %v265 = vmax.f32 %v79, 0.0
  %v266 = vmax.f32 %v80, 0.0
  %v267 = vmax.f32 %v81, 0.0
  %v268 = vmax.f32 %v82, 0.0
  %v269 = vmax.f32 %v83, 0.0
  %v270 = vmax.f32 %v84, 0.0
  %v271 = vmax.f32 %v85, 0.0
  %v272 = vmax.f32 %v86, 0.0
  %v273 = vmax.f32 %v87, 0.0
  %v274 = vmax.f32 %v88, 0.0
  %v275 = vmax.f32 %v89, 0.0
  %v276 = vmax.f32 %v90, 0.0
  %v277 = vmax.f32 %v91, 0.0
  %v278 = vmax.f32 %v92, 0.0
  %v279 = vmax.f32 %v93, 0.0
  %v280 = vmax.f32 %v94, 0.0
  %v281 = vmax.f32 %v95, 0.0
  %v282 = vmax.f32 %v96, 0.0
  %v283 = vmax.f32 %v97, 0.0
  %v284 = vmax.f32 %v98, 0.0
  %v285 = vmax.f32 %v99, 0.0
  %v286 = vmax.f32 %v100, 0.0
  %v287 = vmax.f32 %v101, 0.0
  %v288 = vmax.f32 %v102, 0.0
  %v289 = vmax.f32 %v103, 0.0
  %v290 = vmax.f32 %v104, 0.0
  %v291 = vmax.f32 %v105, 0.0
  %v292 = vmax.f32 %v106, 0.0
  %v293 = vmax.f32 %v107, 0.0
  %v294 = vmax.f32 %v108, 0.0
  %v295 = vmax.f32 %v109, 0.0
  %v296 = vmax.f32 %v110, 0.0
  %v297 = vmax.f32 %v111, 0.0
  %v298 = vmax.f32 %v112, 0.0
  %v299 = vmax.f32 %v113, 0.0
  %v300 = vmax.f32 %v114, 0.0
  %v301 = vmax.f32 %v115, 0.0
  %v302 = vmax.f32 %v116, 0.0
  %v303 = vmax.f32 %v117, 0.0
  %v304 = vmax.f32 %v118, 0.0
  %v305 = vmax.f32 %v119, 0.0
  %v306 = vmax.f32 %v120, 0.0
  %v307 = vmax.f32 %v121, 0.0
  %v308 = vmax.f32 %v122, 0.0
  %v309 = vmax.f32 %v123, 0.0
  %v310 = vmax.f32 %v124, 0.0
  %v311 = vmax.f32 %v125, 0.0
  %v312 = vmax.f32 %v126, 0.0
  %v313 = vmax.f32 %v127, 0.0
  %v314 = vmax.f32 %v128, 0.0
  %v315 = vmax.f32 %v129, 0.0
  %v316 = vmax.f32 %v130, 0.0
  %v317 = vmax.f32 %v131, 0.0
  %v318 = vmax.f32 %v132, 0.0
  %v319 = vmax.f32 %v133, 0.0
  %v320 = vmax.f32 %v134, 0.0
  %v321 = vmax.f32 %v135, 0.0
  %v322 = vmax.f32 %v136, 0.0
  %v323 = vmax.f32 %v137, 0.0
  %v324 = vmax.f32 %v138, 0.0
  %v325 = vmax.f32 %v139, 0.0
  %v326 = vmax.f32 %v140, 0.0
  %v327 = vmax.f32 %v141, 0.0
  %v328 = vmax.f32 %v142, 0.0
  %v329 = vmax.f32 %v143, 0.0
  %v330 = vmax.f32 %v144, 0.0
  %v331 = vmax.f32 %v145, 0.0
  %v332 = vmax.f32 %v146, 0.0
  %v333 = vmax.f32 %v147, 0.0
  %v334 = vmax.f32 %v148, 0.0
  %v335 = vmax.f32 %v149, 0.0
  %v336 = vmax.f32 %v150, 0.0
  %v337 = vmax.f32 %v151, 0.0
  %v338 = vmax.f32 %v152, 0.0
  %v339 = vmax.f32 %v153, 0.0
  %v340 = vmax.f32 %v154, 0.0
  %v341 = vmax.f32 %v155, 0.0
  %v342 = vmax.f32 %v156, 0.0
  %v343 = vmax.f32 %v157, 0.0
  %v344 = vmax.f32 %v158, 0.0
  %v345 = vmax.f32 %v159, 0.0
  %v346 = vmax.f32 %v160, 0.0
  %v347 = vmax.f32 %v161, 0.0
  %v348 = vmax.f32 %v162, 0.0
  %v349 = vmax.f32 %v163, 0.0
  %v350 = vmax.f32 %v164, 0.0
  %v351 = vmax.f32 %v165, 0.0
  %v352 = vmax.f32 %v166, 0.0
  %v353 = vmax.f32 %v167, 0.0
  %v354 = vmax.f32 %v168, 0.0
  %v355 = vmax.f32 %v169, 0.0
  %v356 = vmax.f32 %v170, 0.0
  %v357 = vmax.f32 %v171, 0.0
  %v358 = vmax.f32 %v172, 0.0
  %v359 = vmax.f32 %v173, 0.0
  %v360 = vmax.f32 %v174, 0.0
  %v361 = vmax.f32 %v175, 0.0
  %v362 = vmax.f32 %v176, 0.0
  %v363 = vmax.f32 %v177, 0.0
  %v364 = vmax.f32 %v178, 0.0
  %v365 = vmax.f32 %v179, 0.0
  %v366 = vmax.f32 %v180, 0.0
  %v367 = vmax.f32 %v181, 0.0
  %v368 = vmax.f32 %v182, 0.0
  %v369 = vmax.f32 %v183, 0.0
  %v370 = vmax.f32 %v184, 0.0
  %v371 = vmax.f32 %v185, 0.0
  %v372 = vmax.f32 %v186, 0.0
  %v373 = vmax.f32 %v187, 0.0
  %v374 = vmax.f32 %v188, 0.0
  %v375 = vmax.f32 %v189, 0.0
  %v376 = vmax.f32 %v190, 0.0
  %v377 = vmax.f32 %v191, 0.0
  %v378 = vmax.f32 %v192, 0.0
  %v379 = vmax.f32 %v193, 0.0
  %v380 = vmax.f32 %v194, 0.0
  %v381 = vmax.f32 %v195, 0.0
  %v382 = vmax.f32 %v196, 0.0
  %v383 = vmax.f32 %v197, 0.0
  %v384 = vmax.f32 %v198, 0.0
  %v385 = vmax.f32 %v199, 0.0
  %v386 = vmax.f32 %v200, 0.0
  %v387 = vmax.f32 %v201, 0.0
  %v388 = vmax.f32 %v202, 0.0
  %v389 = vmax.f32 %v203, 0.0
  %v390 = vpack.c.bf16 %v205, %v204
  %v391 = vpack.c.bf16 %v207, %v206
  %v392 = vpack.c.bf16 %v209, %v208
  %v393 = vpack.c.bf16 %v211, %v210
  %v394 = vpack.c.bf16 %v213, %v212
  %v395 = vpack.c.bf16 %v215, %v214
  %v396 = vpack.c.bf16 %v217, %v216
  %v397 = vpack.c.bf16 %v219, %v218
  %v398 = vpack.c.bf16 %v221, %v220
  %v399 = vpack.c.bf16 %v223, %v222
  %v400 = vpack.c.bf16 %v225, %v224
  %v401 = vpack.c.bf16 %v227, %v226
  %v402 = vpack.c.bf16 %v229, %v228
  %v403 = vpack.c.bf16 %v231, %v230
  %v404 = vpack.c.bf16 %v233, %v232
  %v405 = vpack.c.bf16 %v235, %v234
  %v406 = vpack.c.bf16 %v237, %v236
  %v407 = vpack.c.bf16 %v239, %v238
  %v408 = vpack.c.bf16 %v241, %v240
  %v409 = vpack.c.bf16 %v243, %v242
  %v410 = vpack.c.bf16 %v245, %v244
  %v411 = vpack.c.bf16 %v247, %v246
  %v412 = vpack.c.bf16 %v249, %v248
  %v413 = vpack.c.bf16 %v251, %v250
  %v414 = vpack.c.bf16 %v253, %v252
  %v415 = vpack.c.bf16 %v255, %v254
  %v416 = vpack.c.bf16 %v257, %v256
  %v417 = vpack.c.bf16 %v259, %v258
  %v418 = vpack.c.bf16 %v261, %v260
  %v419 = vpack.c.bf16 %v263, %v262
  %v420 = vpack.c.bf16 %v265, %v264
  %v421 = vpack.c.bf16 %v267, %v266
  %v422 = vpack.c.bf16 %v269, %v268
  %v423 = vpack.c.bf16 %v271, %v270
  %v424 = vpack.c.bf16 %v273, %v272
  %v425 = vpack.c.bf16 %v275, %v274
  %v426 = vpack.c.bf16 %v277, %v276
  %v427 = vpack.c.bf16 %v279, %v278
  %v428 = vpack.c.bf16 %v281, %v280
  %v429 = vpack.c.bf16 %v283, %v282
  %v430 = vpack.c.bf16 %v285, %v284
  %v431 = vpack.c.bf16 %v287, %v286
  %v432 = vpack.c.bf16 %v289, %v288
  %v433 = vpack.c.bf16 %v291, %v290
  %v434 = vpack.c.bf16 %v293, %v292
  %v435 = vpack.c.bf16 %v295, %v294
  %v436 = vpack.c.bf16 %v297, %v296
  %v437 = vpack.c.bf16 %v299, %v298
  %v438 = vpack.c.bf16 %v301, %v300
  %v439 = vpack.c.bf16 %v303, %v302
  %v440 = vpack.c.bf16 %v305, %v304
  %v441 = vpack.c.bf16 %v307, %v306
  %v442 = vpack.c.bf16 %v309, %v308
  %v443 = vpack.c.bf16 %v311, %v310
  %v444 = vpack.c.bf16 %v313, %v312
  %v445 = vpack.c.bf16 %v315, %v314
  %v446 = vpack.c.bf16 %v317, %v316
  %v447 = vpack.c.bf16 %v319, %v318
  %v448 = vpack.c.bf16 %v321, %v320
  %v449 = vpack.c.bf16 %v323, %v322
  %v450 = vpack.c.bf16 %v325, %v324
  %v451 = vpack.c.bf16 %v327, %v326
  %v452 = vpack.c.bf16 %v329, %v328
  %v453 = vpack.c.bf16 %v331, %v330
  %v454 = vpack.c.bf16 %v333, %v332
  %v455 = vpack.c.bf16 %v335, %v334
  %v456 = vpack.c.bf16 %v337, %v336
  %v457 = vpack.c.bf16 %v339, %v338
  %v458 = vpack.c.bf16 %v341, %v340
  %v459 = vpack.c.bf16 %v343, %v342
  %v460 = vpack.c.bf16 %v345, %v344
  %v461 = vpack.c.bf16 %v347, %v346
  %v462 = vpack.c.bf16 %v349, %v348
  %v463 = vpack.c.bf16 %v351, %v350
  %v464 = vpack.c.bf16 %v353, %v352
  %v465 = vpack.c.bf16 %v355, %v354
  %v466 = vpack.c.bf16 %v357, %v356
  %v467 = vpack.c.bf16 %v359, %v358
  %v468 = vpack.c.bf16 %v361, %v360
  %v469 = vpack.c.bf16 %v363, %v362
  %v470 = vpack.c.bf16 %v365, %v364
  %v471 = vpack.c.bf16 %v367, %v366
  %v472 = vpack.c.bf16 %v369, %v368
  %v473 = vpack.c.bf16 %v371, %v370
  %v474 = vpack.c.bf16 %v373, %v372
  %v475 = vpack.c.bf16 %v375, %v374
  %v476 = vpack.c.bf16 %v377, %v376
  %v477 = vpack.c.bf16 %v379, %v378
  %v478 = vpack.c.bf16 %v381, %v380
  %v479 = vpack.c.bf16 %v383, %v382
  %v480 = vpack.c.bf16 %v385, %v384
  %v481 = vpack.c.bf16 %v387, %v386
  %v482 = vpack.c.bf16 %v389, %v388
  %v483 = vld [vmem:[%s1] sm:$0xff]
  %v484 = vld [vmem:[%s1 + $0x8] sm:$0xff]
  %v485 = vld [vmem:[%s1 + $0x10] sm:$0xff]
  %v486 = vld [vmem:[%s1 + $0x18] sm:$0xff]
  %v487 = vld [vmem:[%s1 + $0x20] sm:$0xff]
  %v488 = vld [vmem:[%s1 + $0x28] sm:$0xff]
  %v489 = vld [vmem:[%s1 + $0x30] sm:$0xff]
  %v490 = vld [vmem:[%s1 + $0x38] sm:$0xff]
  %v491 = vld [vmem:[%s1 + $0x40] sm:$0xff]
  %v492 = vld [vmem:[%s1 + $0x48] sm:$0xff]
  %v493 = vld [vmem:[%s1 + $0x50] sm:$0xff]
  %v494 = vld [vmem:[%s1 + $0x58] sm:$0xff]
  %v495 = vld [vmem:[%s1 + $0x60] sm:$0xff]
  %v496 = vld [vmem:[%s1 + $0x68] sm:$0xff]
  %v497 = vld [vmem:[%s1 + $0x70] sm:$0xff]
  %v498 = vld [vmem:[%s1 + $0x78] sm:$0xff]
  %v499 = vld [vmem:[%s1 + $0x80] sm:$0xff]
  %v500 = vld [vmem:[%s1 + $0x88] sm:$0xff]
  %v501 = vld [vmem:[%s1 + $0x90] sm:$0xff]
  %v502 = vld [vmem:[%s1 + $0x98] sm:$0xff]
  %v503 = vld [vmem:[%s1 + $0xa0] sm:$0xff]
  %v504 = vld [vmem:[%s1 + $0xa8] sm:$0xff]
  %v505 = vld [vmem:[%s1 + $0xb0] sm:$0xff]
  %v506 = vld [vmem:[%s1 + $0xb8] sm:$0xff]
  %v507 = vld [vmem:[%s1 + $0xc0] sm:$0xff]
  %v508 = vld [vmem:[%s1 + $0xc8] sm:$0xff]
  %v509 = vld [vmem:[%s1 + $0xd0] sm:$0xff]
  %v510 = vld [vmem:[%s1 + $0xd8] sm:$0xff]
  %v511 = vld [vmem:[%s1 + $0xe0] sm:$0xff]
  %v512 = vld [vmem:[%s1 + $0xe8] sm:$0xff]
  %v513 = vld [vmem:[%s1 + $0xf0] sm:$0xff]
  %v514 = vld [vmem:[%s1 + $0xf8] sm:$0xff]
  %v515 = vld [vmem:[%s1 + $0x100] sm:$0xff]
  %v516 = vld [vmem:[%s1 + $0x108] sm:$0xff]
  %v517 = vld [vmem:[%s1 + $0x110] sm:$0xff]
  %v518 = vld [vmem:[%s1 + $0x118] sm:$0xff]
  %v519 = vld [vmem:[%s1 + $0x120] sm:$0xff]
  %v520 = vld [vmem:[%s1 + $0x128] sm:$0xff]
  %v521 = vld [vmem:[%s1 + $0x130] sm:$0xff]
  %v522 = vld [vmem:[%s1 + $0x138] sm:$0xff]
  %v523 = vld [vmem:[%s1 + $0x140] sm:$0xff]
  %v524 = vld [vmem:[%s1 + $0x148] sm:$0xff]
  %v525 = vld [vmem:[%s1 + $0x150] sm:$0xff]
  %v526 = vld [vmem:[%s1 + $0x158] sm:$0xff]
  %v527 = vld [vmem:[%s1 + $0x160] sm:$0xff]
  %v528 = vld [vmem:[%s1 + $0x168] sm:$0xff]
  %v529 = vld [vmem:[%s1 + $0x170] sm:$0xff]
  %v530 = vld [vmem:[%s1 + $0x178] sm:$0xff]
  %v531 = vld [vmem:[%s1 + $0x180] sm:$0xff]
  %v532 = vld [vmem:[%s1 + $0x188] sm:$0xff]
  %v533 = vld [vmem:[%s1 + $0x190] sm:$0xff]
  %v534 = vld [vmem:[%s1 + $0x198] sm:$0xff]
  %v535 = vld [vmem:[%s1 + $0x1a0] sm:$0xff]
  %v536 = vld [vmem:[%s1 + $0x1a8] sm:$0xff]
  %v537 = vld [vmem:[%s1 + $0x1b0] sm:$0xff]
  %v538 = vld [vmem:[%s1 + $0x1b8] sm:$0xff]
  %v539 = vld [vmem:[%s1 + $0x1c0] sm:$0xff]
  %v540 = vld [vmem:[%s1 + $0x1c8] sm:$0xff]
  %v541 = vld [vmem:[%s1 + $0x1d0] sm:$0xff]
  %v542 = vld [vmem:[%s1 + $0x1d8] sm:$0xff]
  %v543 = vld [vmem:[%s1 + $0x1e0] sm:$0xff]
  %v544 = vld [vmem:[%s1 + $0x1e8] sm:$0xff]
  %v545 = vld [vmem:[%s1 + $0x1f0] sm:$0xff]
  %v546 = vld [vmem:[%s1 + $0x1f8] sm:$0xff]
  %v547 = vld [vmem:[%s1 + $0x200] sm:$0xff]
  %v548 = vld [vmem:[%s1 + $0x208] sm:$0xff]
  %v549 = vld [vmem:[%s1 + $0x210] sm:$0xff]
  %v550 = vld [vmem:[%s1 + $0x218] sm:$0xff]
  %v551 = vld [vmem:[%s1 + $0x220] sm:$0xff]
  %v552 = vld [vmem:[%s1 + $0x228] sm:$0xff]
  %v553 = vld [vmem:[%s1 + $0x230] sm:$0xff]
  %v554 = vld [vmem:[%s1 + $0x238] sm:$0xff]
  %v555 = vld [vmem:[%s1 + $0x240] sm:$0xff]
  %v556 = vld [vmem:[%s1 + $0x248] sm:$0xff]
  %v557 = vld [vmem:[%s1 + $0x250] sm:$0xff]
  %v558 = vld [vmem:[%s1 + $0x258] sm:$0xff]
  %v559 = vld [vmem:[%s1 + $0x260] sm:$0xff]
  %v560 = vld [vmem:[%s1 + $0x268] sm:$0xff]
  %v561 = vld [vmem:[%s1 + $0x270] sm:$0xff]
  %v562 = vld [vmem:[%s1 + $0x278] sm:$0xff]
  %v563 = vld [vmem:[%s1 + $0x280] sm:$0xff]
  %v564 = vld [vmem:[%s1 + $0x288] sm:$0xff]
  %v565 = vld [vmem:[%s1 + $0x290] sm:$0xff]
  %v566 = vld [vmem:[%s1 + $0x298] sm:$0xff]
  %v567 = vld [vmem:[%s1 + $0x2a0] sm:$0xff]
  %v568 = vld [vmem:[%s1 + $0x2a8] sm:$0xff]
  %v569 = vld [vmem:[%s1 + $0x2b0] sm:$0xff]
  %v570 = vld [vmem:[%s1 + $0x2b8] sm:$0xff]
  %v571 = vld [vmem:[%s1 + $0x2c0] sm:$0xff]
  %v572 = vld [vmem:[%s1 + $0x2c8] sm:$0xff]
  %v573 = vld [vmem:[%s1 + $0x2d0] sm:$0xff]
  %v574 = vld [vmem:[%s1 + $0x2d8] sm:$0xff]
  %v575 = vld [vmem:[%s1 + $0x2e0] sm:$0xff]
  %v576 = vld [vmem:[%s1 + $0x2e8] sm:$0xff]
  %v577 = vld [vmem:[%s1 + $0x2f0] sm:$0xff]
  %v578 = vld [vmem:[%s1 + $0x2f8] sm:$0xff]
  %v579 = vld [vmem:[%s1 + $0x300] sm:$0xff]
  %v580 = vld [vmem:[%s1 + $0x308] sm:$0xff]
  %v581 = vld [vmem:[%s1 + $0x310] sm:$0xff]
  %v582 = vld [vmem:[%s1 + $0x318] sm:$0xff]
  %v583 = vld [vmem:[%s1 + $0x320] sm:$0xff]
  %v584 = vld [vmem:[%s1 + $0x328] sm:$0xff]
  %v585 = vld [vmem:[%s1 + $0x330] sm:$0xff]
  %v586 = vld [vmem:[%s1 + $0x338] sm:$0xff]
  %v587 = vld [vmem:[%s1 + $0x340] sm:$0xff]
  %v588 = vld [vmem:[%s1 + $0x348] sm:$0xff]
  %v589 = vld [vmem:[%s1 + $0x350] sm:$0xff]
  %v590 = vld [vmem:[%s1 + $0x358] sm:$0xff]
  %v591 = vld [vmem:[%s1 + $0x360] sm:$0xff]
  %v592 = vld [vmem:[%s1 + $0x368] sm:$0xff]
  %v593 = vld [vmem:[%s1 + $0x370] sm:$0xff]
  %v594 = vld [vmem:[%s1 + $0x378] sm:$0xff]
  %v595 = vld [vmem:[%s1 + $0x380] sm:$0xff]
  %v596 = vld [vmem:[%s1 + $0x388] sm:$0xff]
  %v597 = vld [vmem:[%s1 + $0x390] sm:$0xff]
  %v598 = vld [vmem:[%s1 + $0x398] sm:$0xff]
  %v599 = vld [vmem:[%s1 + $0x3a0] sm:$0xff]
  %v600 = vld [vmem:[%s1 + $0x3a8] sm:$0xff]
  %v601 = vld [vmem:[%s1 + $0x3b0] sm:$0xff]
  %v602 = vld [vmem:[%s1 + $0x3b8] sm:$0xff]
  %v603 = vld [vmem:[%s1 + $0x3c0] sm:$0xff]
  %v604 = vld [vmem:[%s1 + $0x3c8] sm:$0xff]
  %v605 = vld [vmem:[%s1 + $0x3d0] sm:$0xff]
  %v606 = vld [vmem:[%s1 + $0x3d8] sm:$0xff]
  %v607 = vld [vmem:[%s1 + $0x3e0] sm:$0xff]
  %v608 = vld [vmem:[%s1 + $0x3e8] sm:$0xff]
  %v609 = vld [vmem:[%s1 + $0x3f0] sm:$0xff]
  %v610 = vld [vmem:[%s1 + $0x3f8] sm:$0xff]
  %v611 = vld [vmem:[%s1 + $0x400] sm:$0xff]
  %v612 = vld [vmem:[%s1 + $0x408] sm:$0xff]
  %v613 = vld [vmem:[%s1 + $0x410] sm:$0xff]
  %v614 = vld [vmem:[%s1 + $0x418] sm:$0xff]
  %v615 = vld [vmem:[%s1 + $0x420] sm:$0xff]
  %v616 = vld [vmem:[%s1 + $0x428] sm:$0xff]
  %v617 = vld [vmem:[%s1 + $0x430] sm:$0xff]
  %v618 = vld [vmem:[%s1 + $0x438] sm:$0xff]
  %v619 = vld [vmem:[%s1 + $0x440] sm:$0xff]
  %v620 = vld [vmem:[%s1 + $0x448] sm:$0xff]
  %v621 = vld [vmem:[%s1 + $0x450] sm:$0xff]
  %v622 = vld [vmem:[%s1 + $0x458] sm:$0xff]
  %v623 = vld [vmem:[%s1 + $0x460] sm:$0xff]
  %v624 = vld [vmem:[%s1 + $0x468] sm:$0xff]
  %v625 = vld [vmem:[%s1 + $0x470] sm:$0xff]
  %v626 = vld [vmem:[%s1 + $0x478] sm:$0xff]
  %v771 = vunpack.c.l.b16 %v483
  %v772 = vunpack.c.h.b16 %v483
  %v773 = vunpack.c.l.b16 %v484
  %v774 = vunpack.c.h.b16 %v484
  %v775 = vunpack.c.l.b16 %v485
  %v776 = vunpack.c.h.b16 %v485
  %v777 = vunpack.c.l.b16 %v486
  %v778 = vunpack.c.h.b16 %v486
  %v779 = vunpack.c.l.b16 %v487
  %v780 = vunpack.c.h.b16 %v487
  %v781 = vunpack.c.l.b16 %v488
  %v782 = vunpack.c.h.b16 %v488
  %v783 = vunpack.c.l.b16 %v489
  %v784 = vunpack.c.h.b16 %v489
  %v785 = vunpack.c.l.b16 %v490
  %v786 = vunpack.c.h.b16 %v490
  %v787 = vunpack.c.l.b16 %v491
  %v788 = vunpack.c.h.b16 %v491
  %v789 = vunpack.c.l.b16 %v492
  %v790 = vunpack.c.h.b16 %v492
  %v791 = vunpack.c.l.b16 %v493
  %v792 = vunpack.c.h.b16 %v493
  %v793 = vunpack.c.l.b16 %v494
  %v794 = vunpack.c.h.b16 %v494
  %v795 = vunpack.c.l.b16 %v495
  %v796 = vunpack.c.h.b16 %v495
  %v797 = vunpack.c.l.b16 %v496
  %v798 = vunpack.c.h.b16 %v496
  %v799 = vunpack.c.l.b16 %v497
  %v800 = vunpack.c.h.b16 %v497
  %v801 = vunpack.c.l.b16 %v498
  %v802 = vunpack.c.h.b16 %v498
  %v803 = vunpack.c.l.b16 %v499
  %v804 = vunpack.c.h.b16 %v499
  %v805 = vunpack.c.l.b16 %v500
  %v806 = vunpack.c.h.b16 %v500
  %v807 = vunpack.c.l.b16 %v501
  %v808 = vunpack.c.h.b16 %v501
  %v809 = vunpack.c.l.b16 %v502
  %v810 = vunpack.c.h.b16 %v502
  %v811 = vunpack.c.l.b16 %v503
  %v812 = vunpack.c.h.b16 %v503
  %v813 = vunpack.c.l.b16 %v504
  %v814 = vunpack.c.h.b16 %v504
  %v815 = vunpack.c.l.b16 %v505
  %v816 = vunpack.c.h.b16 %v505
  %v817 = vunpack.c.l.b16 %v506
  %v818 = vunpack.c.h.b16 %v506
  %v819 = vunpack.c.l.b16 %v507
  %v820 = vunpack.c.h.b16 %v507
  %v821 = vunpack.c.l.b16 %v508
  %v822 = vunpack.c.h.b16 %v508
  %v823 = vunpack.c.l.b16 %v509
  %v824 = vunpack.c.h.b16 %v509
  %v825 = vunpack.c.l.b16 %v510
  %v826 = vunpack.c.h.b16 %v510
  %v827 = vunpack.c.l.b16 %v511
  %v828 = vunpack.c.h.b16 %v511
  %v829 = vunpack.c.l.b16 %v512
  %v830 = vunpack.c.h.b16 %v512
  %v831 = vunpack.c.l.b16 %v513
  %v832 = vunpack.c.h.b16 %v513
  %v833 = vunpack.c.l.b16 %v514
  %v834 = vunpack.c.h.b16 %v514
  %v835 = vunpack.c.l.b16 %v515
  %v836 = vunpack.c.h.b16 %v515
  %v837 = vunpack.c.l.b16 %v516
  %v838 = vunpack.c.h.b16 %v516
  %v839 = vunpack.c.l.b16 %v517
  %v840 = vunpack.c.h.b16 %v517
  %v841 = vunpack.c.l.b16 %v518
  %v842 = vunpack.c.h.b16 %v518
  %v843 = vunpack.c.l.b16 %v519
  %v844 = vunpack.c.h.b16 %v519
  %v845 = vunpack.c.l.b16 %v520
  %v846 = vunpack.c.h.b16 %v520
  %v847 = vunpack.c.l.b16 %v521
  %v848 = vunpack.c.h.b16 %v521
  %v849 = vunpack.c.l.b16 %v522
  %v850 = vunpack.c.h.b16 %v522
  %v851 = vunpack.c.l.b16 %v523
  %v852 = vunpack.c.h.b16 %v523
  %v853 = vunpack.c.l.b16 %v524
  %v854 = vunpack.c.h.b16 %v524
  %v855 = vunpack.c.l.b16 %v525
  %v856 = vunpack.c.h.b16 %v525
  %v857 = vunpack.c.l.b16 %v526
  %v858 = vunpack.c.h.b16 %v526
  %v859 = vunpack.c.l.b16 %v527
  %v860 = vunpack.c.h.b16 %v527
  %v861 = vunpack.c.l.b16 %v528
  %v862 = vunpack.c.h.b16 %v528
  %v863 = vunpack.c.l.b16 %v529
  %v864 = vunpack.c.h.b16 %v529
  %v865 = vunpack.c.l.b16 %v530
  %v866 = vunpack.c.h.b16 %v530
  %v867 = vunpack.c.l.b16 %v531
  %v868 = vunpack.c.h.b16 %v531
  %v869 = vunpack.c.l.b16 %v532
  %v870 = vunpack.c.h.b16 %v532
  %v871 = vunpack.c.l.b16 %v533
  %v872 = vunpack.c.h.b16 %v533
  %v873 = vunpack.c.l.b16 %v534
  %v874 = vunpack.c.h.b16 %v534
  %v875 = vunpack.c.l.b16 %v535
  %v876 = vunpack.c.h.b16 %v535
  %v877 = vunpack.c.l.b16 %v536
  %v878 = vunpack.c.h.b16 %v536
  %v879 = vunpack.c.l.b16 %v537
  %v880 = vunpack.c.h.b16 %v537
  %v881 = vunpack.c.l.b16 %v538
  %v882 = vunpack.c.h.b16 %v538
  %v883 = vunpack.c.l.b16 %v539
  %v884 = vunpack.c.h.b16 %v539
  %v885 = vunpack.c.l.b16 %v540
  %v886 = vunpack.c.h.b16 %v540
  %v887 = vunpack.c.l.b16 %v541
  %v888 = vunpack.c.h.b16 %v541
  %v889 = vunpack.c.l.b16 %v542
  %v890 = vunpack.c.h.b16 %v542
  %v891 = vunpack.c.l.b16 %v543
  %v892 = vunpack.c.h.b16 %v543
  %v893 = vunpack.c.l.b16 %v544
  %v894 = vunpack.c.h.b16 %v544
  %v895 = vunpack.c.l.b16 %v545
  %v896 = vunpack.c.h.b16 %v545
  %v897 = vunpack.c.l.b16 %v546
  %v898 = vunpack.c.h.b16 %v546
  %v899 = vunpack.c.l.b16 %v547
  %v900 = vunpack.c.h.b16 %v547
  %v901 = vunpack.c.l.b16 %v548
  %v902 = vunpack.c.h.b16 %v548
  %v903 = vunpack.c.l.b16 %v549
  %v904 = vunpack.c.h.b16 %v549
  %v905 = vunpack.c.l.b16 %v550
  %v906 = vunpack.c.h.b16 %v550
  %v907 = vunpack.c.l.b16 %v551
  %v908 = vunpack.c.h.b16 %v551
  %v909 = vunpack.c.l.b16 %v552
  %v910 = vunpack.c.h.b16 %v552
  %v911 = vunpack.c.l.b16 %v553
  %v912 = vunpack.c.h.b16 %v553
  %v913 = vunpack.c.l.b16 %v554
  %v914 = vunpack.c.h.b16 %v554
  %v915 = vunpack.c.l.b16 %v555
  %v916 = vunpack.c.h.b16 %v555
  %v917 = vunpack.c.l.b16 %v556
  %v918 = vunpack.c.h.b16 %v556
  %v919 = vunpack.c.l.b16 %v557
  %v920 = vunpack.c.h.b16 %v557
  %v921 = vunpack.c.l.b16 %v558
  %v922 = vunpack.c.h.b16 %v558
  %v923 = vunpack.c.l.b16 %v559
  %v924 = vunpack.c.h.b16 %v559
  %v925 = vunpack.c.l.b16 %v560
  %v926 = vunpack.c.h.b16 %v560
  %v927 = vunpack.c.l.b16 %v561
  %v928 = vunpack.c.h.b16 %v561
  %v929 = vunpack.c.l.b16 %v562
  %v930 = vunpack.c.h.b16 %v562
  %v931 = vunpack.c.l.b16 %v563
  %v932 = vunpack.c.h.b16 %v563
  %v933 = vunpack.c.l.b16 %v564
  %v934 = vunpack.c.h.b16 %v564
  %v935 = vunpack.c.l.b16 %v565
  %v936 = vunpack.c.h.b16 %v565
  %v937 = vunpack.c.l.b16 %v566
  %v938 = vunpack.c.h.b16 %v566
  %v939 = vunpack.c.l.b16 %v567
  %v940 = vunpack.c.h.b16 %v567
  %v941 = vunpack.c.l.b16 %v568
  %v942 = vunpack.c.h.b16 %v568
  %v943 = vunpack.c.l.b16 %v569
  %v944 = vunpack.c.h.b16 %v569
  %v945 = vunpack.c.l.b16 %v570
  %v946 = vunpack.c.h.b16 %v570
  %v947 = vunpack.c.l.b16 %v571
  %v948 = vunpack.c.h.b16 %v571
  %v949 = vunpack.c.l.b16 %v572
  %v950 = vunpack.c.h.b16 %v572
  %v951 = vunpack.c.l.b16 %v573
  %v952 = vunpack.c.h.b16 %v573
  %v953 = vunpack.c.l.b16 %v574
  %v954 = vunpack.c.h.b16 %v574
  %v955 = vunpack.c.l.b16 %v575
  %v956 = vunpack.c.h.b16 %v575
  %v957 = vunpack.c.l.b16 %v576
  %v958 = vunpack.c.h.b16 %v576
  %v959 = vunpack.c.l.b16 %v577
  %v960 = vunpack.c.h.b16 %v577
  %v961 = vunpack.c.l.b16 %v578
  %v962 = vunpack.c.h.b16 %v578
  %v963 = vunpack.c.l.b16 %v579
  %v964 = vunpack.c.h.b16 %v579
  %v965 = vunpack.c.l.b16 %v580
  %v966 = vunpack.c.h.b16 %v580
  %v967 = vunpack.c.l.b16 %v581
  %v968 = vunpack.c.h.b16 %v581
  %v969 = vunpack.c.l.b16 %v582
  %v970 = vunpack.c.h.b16 %v582
  %v971 = vunpack.c.l.b16 %v583
  %v972 = vunpack.c.h.b16 %v583
  %v973 = vunpack.c.l.b16 %v584
  %v974 = vunpack.c.h.b16 %v584
  %v975 = vunpack.c.l.b16 %v585
  %v976 = vunpack.c.h.b16 %v585
  %v977 = vunpack.c.l.b16 %v586
  %v978 = vunpack.c.h.b16 %v586
  %v979 = vunpack.c.l.b16 %v587
  %v980 = vunpack.c.h.b16 %v587
  %v981 = vunpack.c.l.b16 %v588
  %v982 = vunpack.c.h.b16 %v588
  %v983 = vunpack.c.l.b16 %v589
  %v984 = vunpack.c.h.b16 %v589
  %v985 = vunpack.c.l.b16 %v590
  %v986 = vunpack.c.h.b16 %v590
  %v987 = vunpack.c.l.b16 %v591
  %v988 = vunpack.c.h.b16 %v591
  %v989 = vunpack.c.l.b16 %v592
  %v990 = vunpack.c.h.b16 %v592
  %v991 = vunpack.c.l.b16 %v593
  %v992 = vunpack.c.h.b16 %v593
  %v993 = vunpack.c.l.b16 %v594
  %v994 = vunpack.c.h.b16 %v594
  %v995 = vunpack.c.l.b16 %v595
  %v996 = vunpack.c.h.b16 %v595
  %v997 = vunpack.c.l.b16 %v596
  %v998 = vunpack.c.h.b16 %v596
  %v999 = vunpack.c.l.b16 %v597
  %v1000 = vunpack.c.h.b16 %v597
  %v1001 = vunpack.c.l.b16 %v598
  %v1002 = vunpack.c.h.b16 %v598
  %v1003 = vunpack.c.l.b16 %v599
  %v1004 = vunpack.c.h.b16 %v599
  %v1005 = vunpack.c.l.b16 %v600
  %v1006 = vunpack.c.h.b16 %v600
  %v1007 = vunpack.c.l.b16 %v601
  %v1008 = vunpack.c.h.b16 %v601
  %v1009 = vunpack.c.l.b16 %v602
  %v1010 = vunpack.c.h.b16 %v602
  %v1011 = vunpack.c.l.b16 %v603
  %v1012 = vunpack.c.h.b16 %v603
  %v1013 = vunpack.c.l.b16 %v604
  %v1014 = vunpack.c.h.b16 %v604
  %v1015 = vunpack.c.l.b16 %v605
  %v1016 = vunpack.c.h.b16 %v605
  %v1017 = vunpack.c.l.b16 %v606
  %v1018 = vunpack.c.h.b16 %v606
  %v1019 = vunpack.c.l.b16 %v607
  %v1020 = vunpack.c.h.b16 %v607
  %v1021 = vunpack.c.l.b16 %v608
  %v1022 = vunpack.c.h.b16 %v608
  %v1023 = vunpack.c.l.b16 %v609
  %v1024 = vunpack.c.h.b16 %v609
  %v1025 = vunpack.c.l.b16 %v610
  %v1026 = vunpack.c.h.b16 %v610
  %v1027 = vunpack.c.l.b16 %v611
  %v1028 = vunpack.c.h.b16 %v611
  %v1029 = vunpack.c.l.b16 %v612
  %v1030 = vunpack.c.h.b16 %v612
  %v1031 = vunpack.c.l.b16 %v613
  %v1032 = vunpack.c.h.b16 %v613
  %v1033 = vunpack.c.l.b16 %v614
  %v1034 = vunpack.c.h.b16 %v614
  %v1035 = vunpack.c.l.b16 %v615
  %v1036 = vunpack.c.h.b16 %v615
  %v1037 = vunpack.c.l.b16 %v616
  %v1038 = vunpack.c.h.b16 %v616
  %v1039 = vunpack.c.l.b16 %v617
  %v1040 = vunpack.c.h.b16 %v617
  %v1041 = vunpack.c.l.b16 %v618
  %v1042 = vunpack.c.h.b16 %v618
  %v1043 = vunpack.c.l.b16 %v619
  %v1044 = vunpack.c.h.b16 %v619
  %v1045 = vunpack.c.l.b16 %v620
  %v1046 = vunpack.c.h.b16 %v620
  %v1047 = vunpack.c.l.b16 %v621
  %v1048 = vunpack.c.h.b16 %v621
  %v1049 = vunpack.c.l.b16 %v622
  %v1050 = vunpack.c.h.b16 %v622
  %v1051 = vunpack.c.l.b16 %v623
  %v1052 = vunpack.c.h.b16 %v623
  %v1053 = vunpack.c.l.b16 %v624
  %v1054 = vunpack.c.h.b16 %v624
  %v1055 = vunpack.c.l.b16 %v625
  %v1056 = vunpack.c.h.b16 %v625
  %v1057 = vunpack.c.l.b16 %v626
  %v1058 = vunpack.c.h.b16 %v626
  %v1059 = vpack.c.b16 %v783, %v771
  %v1060 = vpack.c.b16 %v784, %v772
  %v1061 = vpack.c.b16 %v785, %v773
  %v1062 = vpack.c.b16 %v786, %v774
  %v1063 = vpack.c.b16 %v787, %v775
  %v1064 = vpack.c.b16 %v788, %v776
  %v1065 = vpack.c.b16 %v789, %v777
  %v1066 = vpack.c.b16 %v790, %v778
  %v1067 = vpack.c.b16 %v791, %v779
  %v1068 = vpack.c.b16 %v792, %v780
  %v1069 = vpack.c.b16 %v793, %v781
  %v1070 = vpack.c.b16 %v794, %v782
  %v1071 = vpack.c.b16 %v807, %v795
  %v1072 = vpack.c.b16 %v808, %v796
  %v1073 = vpack.c.b16 %v809, %v797
  %v1074 = vpack.c.b16 %v810, %v798
  %v1075 = vpack.c.b16 %v811, %v799
  %v1076 = vpack.c.b16 %v812, %v800
  %v1077 = vpack.c.b16 %v813, %v801
  %v1078 = vpack.c.b16 %v814, %v802
  %v1079 = vpack.c.b16 %v815, %v803
  %v1080 = vpack.c.b16 %v816, %v804
  %v1081 = vpack.c.b16 %v817, %v805
  %v1082 = vpack.c.b16 %v818, %v806
  %v1083 = vpack.c.b16 %v831, %v819
  %v1084 = vpack.c.b16 %v832, %v820
  %v1085 = vpack.c.b16 %v833, %v821
  %v1086 = vpack.c.b16 %v834, %v822
  %v1087 = vpack.c.b16 %v835, %v823
  %v1088 = vpack.c.b16 %v836, %v824
  %v1089 = vpack.c.b16 %v837, %v825
  %v1090 = vpack.c.b16 %v838, %v826
  %v1091 = vpack.c.b16 %v839, %v827
  %v1092 = vpack.c.b16 %v840, %v828
  %v1093 = vpack.c.b16 %v841, %v829
  %v1094 = vpack.c.b16 %v842, %v830
  %v1095 = vpack.c.b16 %v855, %v843
  %v1096 = vpack.c.b16 %v856, %v844
  %v1097 = vpack.c.b16 %v857, %v845
  %v1098 = vpack.c.b16 %v858, %v846
  %v1099 = vpack.c.b16 %v859, %v847
  %v1100 = vpack.c.b16 %v860, %v848
  %v1101 = vpack.c.b16 %v861, %v849
  %v1102 = vpack.c.b16 %v862, %v850
  %v1103 = vpack.c.b16 %v863, %v851
  %v1104 = vpack.c.b16 %v864, %v852
  %v1105 = vpack.c.b16 %v865, %v853
  %v1106 = vpack.c.b16 %v866, %v854
  %v1107 = vpack.c.b16 %v879, %v867
  %v1108 = vpack.c.b16 %v880, %v868
  %v1109 = vpack.c.b16 %v881, %v869
  %v1110 = vpack.c.b16 %v882, %v870
  %v1111 = vpack.c.b16 %v883, %v871
  %v1112 = vpack.c.b16 %v884, %v872
  %v1113 = vpack.c.b16 %v885, %v873
  %v1114 = vpack.c.b16 %v886, %v874
  %v1115 = vpack.c.b16 %v887, %v875
  %v1116 = vpack.c.b16 %v888, %v876
  %v1117 = vpack.c.b16 %v889, %v877
  %v1118 = vpack.c.b16 %v890, %v878
  %v1119 = vpack.c.b16 %v903, %v891
  %v1120 = vpack.c.b16 %v904, %v892
  %v1121 = vpack.c.b16 %v905, %v893
  %v1122 = vpack.c.b16 %v906, %v894
  %v1123 = vpack.c.b16 %v907, %v895
  %v1124 = vpack.c.b16 %v908, %v896
  %v1125 = vpack.c.b16 %v909, %v897
  %v1126 = vpack.c.b16 %v910, %v898
  %v1127 = vpack.c.b16 %v911, %v899
  %v1128 = vpack.c.b16 %v912, %v900
  %v1129 = vpack.c.b16 %v913, %v901
  %v1130 = vpack.c.b16 %v914, %v902
  %v1131 = vpack.c.b16 %v927, %v915
  %v1132 = vpack.c.b16 %v928, %v916
  %v1133 = vpack.c.b16 %v929, %v917
  %v1134 = vpack.c.b16 %v930, %v918
  %v1135 = vpack.c.b16 %v931, %v919
  %v1136 = vpack.c.b16 %v932, %v920
  %v1137 = vpack.c.b16 %v933, %v921
  %v1138 = vpack.c.b16 %v934, %v922
  %v1139 = vpack.c.b16 %v935, %v923
  %v1140 = vpack.c.b16 %v936, %v924
  %v1141 = vpack.c.b16 %v937, %v925
  %v1142 = vpack.c.b16 %v938, %v926
  %v1143 = vpack.c.b16 %v951, %v939
  %v1144 = vpack.c.b16 %v952, %v940
  %v1145 = vpack.c.b16 %v953, %v941
  %v1146 = vpack.c.b16 %v954, %v942
  %v1147 = vpack.c.b16 %v955, %v943
  %v1148 = vpack.c.b16 %v956, %v944
  %v1149 = vpack.c.b16 %v957, %v945
  %v1150 = vpack.c.b16 %v958, %v946
  %v1151 = vpack.c.b16 %v959, %v947
  %v1152 = vpack.c.b16 %v960, %v948
  %v1153 = vpack.c.b16 %v961, %v949
  %v1154 = vpack.c.b16 %v962, %v950
  %v1155 = vpack.c.b16 %v975, %v963
  %v1156 = vpack.c.b16 %v976, %v964
  %v1157 = vpack.c.b16 %v977, %v965
  %v1158 = vpack.c.b16 %v978, %v966
  %v1159 = vpack.c.b16 %v979, %v967
  %v1160 = vpack.c.b16 %v980, %v968
  %v1161 = vpack.c.b16 %v981, %v969
  %v1162 = vpack.c.b16 %v982, %v970
  %v1163 = vpack.c.b16 %v983, %v971
  %v1164 = vpack.c.b16 %v984, %v972
  %v1165 = vpack.c.b16 %v985, %v973
  %v1166 = vpack.c.b16 %v986, %v974
  %v1167 = vpack.c.b16 %v999, %v987
  %v1168 = vpack.c.b16 %v1000, %v988
  %v1169 = vpack.c.b16 %v1001, %v989
  %v1170 = vpack.c.b16 %v1002, %v990
  %v1171 = vpack.c.b16 %v1003, %v991
  %v1172 = vpack.c.b16 %v1004, %v992
  %v1173 = vpack.c.b16 %v1005, %v993
  %v1174 = vpack.c.b16 %v1006, %v994
  %v1175 = vpack.c.b16 %v1007, %v995
  %v1176 = vpack.c.b16 %v1008, %v996
  %v1177 = vpack.c.b16 %v1009, %v997
  %v1178 = vpack.c.b16 %v1010, %v998
  %v1179 = vpack.c.b16 %v1023, %v1011
  %v1180 = vpack.c.b16 %v1024, %v1012
  %v1181 = vpack.c.b16 %v1025, %v1013
  %v1182 = vpack.c.b16 %v1026, %v1014
  %v1183 = vpack.c.b16 %v1027, %v1015
  %v1184 = vpack.c.b16 %v1028, %v1016
  %v1185 = vpack.c.b16 %v1029, %v1017
  %v1186 = vpack.c.b16 %v1030, %v1018
  %v1187 = vpack.c.b16 %v1031, %v1019
  %v1188 = vpack.c.b16 %v1032, %v1020
  %v1189 = vpack.c.b16 %v1033, %v1021
  %v1190 = vpack.c.b16 %v1034, %v1022
  %v1191 = vpack.c.b16 %v1047, %v1035
  %v1192 = vpack.c.b16 %v1048, %v1036
  %v1193 = vpack.c.b16 %v1049, %v1037
  %v1194 = vpack.c.b16 %v1050, %v1038
  %v1195 = vpack.c.b16 %v1051, %v1039
  %v1196 = vpack.c.b16 %v1052, %v1040
  %v1197 = vpack.c.b16 %v1053, %v1041
  %v1198 = vpack.c.b16 %v1054, %v1042
  %v1199 = vpack.c.b16 %v1055, %v1043
  %v1200 = vpack.c.b16 %v1056, %v1044
  %v1201 = vpack.c.b16 %v1057, %v1045
  %v1202 = vpack.c.b16 %v1058, %v1046
  %vm1335 = vcmask 654336
  %v1337 = vsel %vm1335, %v1070, 0
  %v1340 = vsel %vm1335, %v1082, 0
  %v1343 = vsel %vm1335, %v1094, 0
  %v1346 = vsel %vm1335, %v1106, 0
  %v1349 = vsel %vm1335, %v1118, 0
  %v1352 = vsel %vm1335, %v1130, 0
  %v1355 = vsel %vm1335, %v1142, 0
  %v1358 = vsel %vm1335, %v1154, 0
  %v1361 = vsel %vm1335, %v1166, 0
  %v1364 = vsel %vm1335, %v1178, 0
  %v1367 = vsel %vm1335, %v1190, 0
  %v1370 = vsel %vm1335, %v1202, 0
  %1372 = vmatpush.bf16.msra.mxu0 %v397
  %1373 = vmatpush.bf16.msra.mxu0 %v396
  %1374 = vmatpush.bf16.msra.mxu0 %v395
  %1375 = vmatpush.bf16.msra.mxu0 %v394
  %1376 = vmatpush.bf16.msra.mxu0 %v393
  %1377 = vmatpush.bf16.msra.mxu0 %v392
  %1378 = vmatpush.bf16.msra.mxu0 %v391
  %1379 = vmatpush.bf16.msra.mxu0 %v390
  %1380 = vmatmul.bf16.gmra.mxu0 %v1059
  %v1381 = vpop.f32.mrf.mxu0
  %v1382 = vadd.f32 0.0, %v1381
  %v1383 = vpop.f32.mrf.mxu0
  %v1384 = vadd.f32 0.0, %v1383
  %1385 = vmatmul.bf16.gmra.mxu0 %v1071
  %v1386 = vpop.f32.mrf.mxu0
  %v1387 = vadd.f32 0.0, %v1386
  %v1388 = vpop.f32.mrf.mxu0
  %v1389 = vadd.f32 0.0, %v1388
  %1390 = vmatmul.bf16.gmra.mxu0 %v1083
  %v1391 = vpop.f32.mrf.mxu0
  %v1392 = vadd.f32 0.0, %v1391
  %v1393 = vpop.f32.mrf.mxu0
  %v1394 = vadd.f32 0.0, %v1393
  %1395 = vmatmul.bf16.gmra.mxu0 %v1095
  %v1396 = vpop.f32.mrf.mxu0
  %v1397 = vadd.f32 0.0, %v1396
  %v1398 = vpop.f32.mrf.mxu0
  %v1399 = vadd.f32 0.0, %v1398
  %1400 = vmatmul.bf16.gmra.mxu0 %v1107
  %v1401 = vpop.f32.mrf.mxu0
  %v1402 = vadd.f32 0.0, %v1401
  %v1403 = vpop.f32.mrf.mxu0
  %v1404 = vadd.f32 0.0, %v1403
  %1405 = vmatmul.bf16.gmra.mxu0 %v1119
  %v1406 = vpop.f32.mrf.mxu0
  %v1407 = vadd.f32 0.0, %v1406
  %v1408 = vpop.f32.mrf.mxu0
  %v1409 = vadd.f32 0.0, %v1408
  %1410 = vmatmul.bf16.gmra.mxu0 %v1131
  %v1411 = vpop.f32.mrf.mxu0
  %v1412 = vadd.f32 0.0, %v1411
  %v1413 = vpop.f32.mrf.mxu0
  %v1414 = vadd.f32 0.0, %v1413
  %1415 = vmatmul.bf16.gmra.mxu0 %v1143
  %v1416 = vpop.f32.mrf.mxu0
  %v1417 = vadd.f32 0.0, %v1416
  %v1418 = vpop.f32.mrf.mxu0
  %v1419 = vadd.f32 0.0, %v1418
  %1420 = vmatmul.bf16.gmra.mxu0 %v1155
  %v1421 = vpop.f32.mrf.mxu0
  %v1422 = vadd.f32 0.0, %v1421
  %v1423 = vpop.f32.mrf.mxu0
  %v1424 = vadd.f32 0.0, %v1423
  %1425 = vmatmul.bf16.gmra.mxu0 %v1167
  %v1426 = vpop.f32.mrf.mxu0
  %v1427 = vadd.f32 0.0, %v1426
  %v1428 = vpop.f32.mrf.mxu0
  %v1429 = vadd.f32 0.0, %v1428
  %1430 = vmatmul.bf16.gmra.mxu0 %v1179
  %v1431 = vpop.f32.mrf.mxu0
  %v1432 = vadd.f32 0.0, %v1431
  %v1433 = vpop.f32.mrf.mxu0
  %v1434 = vadd.f32 0.0, %v1433
  %1435 = vmatmul.bf16.gmra.mxu0 %v1191
  %v1436 = vpop.f32.mrf.mxu0
  %v1437 = vadd.f32 0.0, %v1436
  %v1438 = vpop.f32.mrf.mxu0
  %v1439 = vadd.f32 0.0, %v1438
  %1440 = vdwg.mxu0
  %1441 = vmatpush.bf16.msra.mxu0 %v405
  %1442 = vmatpush.bf16.msra.mxu0 %v404
  %1443 = vmatpush.bf16.msra.mxu0 %v403
  %1444 = vmatpush.bf16.msra.mxu0 %v402
  %1445 = vmatpush.bf16.msra.mxu0 %v401
  %1446 = vmatpush.bf16.msra.mxu0 %v400
  %1447 = vmatpush.bf16.msra.mxu0 %v399
  %1448 = vmatpush.bf16.msra.mxu0 %v398
  %1449 = vmatmul.bf16.gmra.mxu0 %v1060
  %v1450 = vpop.f32.mrf.mxu0
  %v1451 = vadd.f32 %v1382, %v1450
  %v1452 = vpop.f32.mrf.mxu0
  %v1453 = vadd.f32 %v1384, %v1452
  %1454 = vmatmul.bf16.gmra.mxu0 %v1072
  %v1455 = vpop.f32.mrf.mxu0
  %v1456 = vadd.f32 %v1387, %v1455
  %v1457 = vpop.f32.mrf.mxu0
  %v1458 = vadd.f32 %v1389, %v1457
  %1459 = vmatmul.bf16.gmra.mxu0 %v1084
  %v1460 = vpop.f32.mrf.mxu0
  %v1461 = vadd.f32 %v1392, %v1460
  %v1462 = vpop.f32.mrf.mxu0
  %v1463 = vadd.f32 %v1394, %v1462
  %1464 = vmatmul.bf16.gmra.mxu0 %v1096
  %v1465 = vpop.f32.mrf.mxu0
  %v1466 = vadd.f32 %v1397, %v1465
  %v1467 = vpop.f32.mrf.mxu0
  %v1468 = vadd.f32 %v1399, %v1467
  %1469 = vmatmul.bf16.gmra.mxu0 %v1108
  %v1470 = vpop.f32.mrf.mxu0
  %v1471 = vadd.f32 %v1402, %v1470
  %v1472 = vpop.f32.mrf.mxu0
  %v1473 = vadd.f32 %v1404, %v1472
  %1474 = vmatmul.bf16.gmra.mxu0 %v1120
  %v1475 = vpop.f32.mrf.mxu0
  %v1476 = vadd.f32 %v1407, %v1475
  %v1477 = vpop.f32.mrf.mxu0
  %v1478 = vadd.f32 %v1409, %v1477
  %1479 = vmatmul.bf16.gmra.mxu0 %v1132
  %v1480 = vpop.f32.mrf.mxu0
  %v1481 = vadd.f32 %v1412, %v1480
  %v1482 = vpop.f32.mrf.mxu0
  %v1483 = vadd.f32 %v1414, %v1482
  %1484 = vmatmul.bf16.gmra.mxu0 %v1144
  %v1485 = vpop.f32.mrf.mxu0
  %v1486 = vadd.f32 %v1417, %v1485
  %v1487 = vpop.f32.mrf.mxu0
  %v1488 = vadd.f32 %v1419, %v1487
  %1489 = vmatmul.bf16.gmra.mxu0 %v1156
  %v1490 = vpop.f32.mrf.mxu0
  %v1491 = vadd.f32 %v1422, %v1490
  %v1492 = vpop.f32.mrf.mxu0
  %v1493 = vadd.f32 %v1424, %v1492
  %1494 = vmatmul.bf16.gmra.mxu0 %v1168
  %v1495 = vpop.f32.mrf.mxu0
  %v1496 = vadd.f32 %v1427, %v1495
  %v1497 = vpop.f32.mrf.mxu0
  %v1498 = vadd.f32 %v1429, %v1497
  %1499 = vmatmul.bf16.gmra.mxu0 %v1180
  %v1500 = vpop.f32.mrf.mxu0
  %v1501 = vadd.f32 %v1432, %v1500
  %v1502 = vpop.f32.mrf.mxu0
  %v1503 = vadd.f32 %v1434, %v1502
  %1504 = vmatmul.bf16.gmra.mxu0 %v1192
  %v1505 = vpop.f32.mrf.mxu0
  %v1506 = vadd.f32 %v1437, %v1505
  %v1507 = vpop.f32.mrf.mxu0
  %v1508 = vadd.f32 %v1439, %v1507
  %1509 = vdwg.mxu0
  %1510 = vmatpush.bf16.msra.mxu0 %v413
  %1511 = vmatpush.bf16.msra.mxu0 %v412
  %1512 = vmatpush.bf16.msra.mxu0 %v411
  %1513 = vmatpush.bf16.msra.mxu0 %v410
  %1514 = vmatpush.bf16.msra.mxu0 %v409
  %1515 = vmatpush.bf16.msra.mxu0 %v408
  %1516 = vmatpush.bf16.msra.mxu0 %v407
  %1517 = vmatpush.bf16.msra.mxu0 %v406
  %1518 = vmatmul.bf16.gmra.mxu0 %v1061
  %v1519 = vpop.f32.mrf.mxu0
  %v1520 = vadd.f32 %v1451, %v1519
  %v1521 = vpop.f32.mrf.mxu0
  %v1522 = vadd.f32 %v1453, %v1521
  %1523 = vmatmul.bf16.gmra.mxu0 %v1073
  %v1524 = vpop.f32.mrf.mxu0
  %v1525 = vadd.f32 %v1456, %v1524
  %v1526 = vpop.f32.mrf.mxu0
  %v1527 = vadd.f32 %v1458, %v1526
  %1528 = vmatmul.bf16.gmra.mxu0 %v1085
  %v1529 = vpop.f32.mrf.mxu0
  %v1530 = vadd.f32 %v1461, %v1529
  %v1531 = vpop.f32.mrf.mxu0
  %v1532 = vadd.f32 %v1463, %v1531
  %1533 = vmatmul.bf16.gmra.mxu0 %v1097
  %v1534 = vpop.f32.mrf.mxu0
  %v1535 = vadd.f32 %v1466, %v1534
  %v1536 = vpop.f32.mrf.mxu0
  %v1537 = vadd.f32 %v1468, %v1536
  %1538 = vmatmul.bf16.gmra.mxu0 %v1109
  %v1539 = vpop.f32.mrf.mxu0
  %v1540 = vadd.f32 %v1471, %v1539
  %v1541 = vpop.f32.mrf.mxu0
  %v1542 = vadd.f32 %v1473, %v1541
  %1543 = vmatmul.bf16.gmra.mxu0 %v1121
  %v1544 = vpop.f32.mrf.mxu0
  %v1545 = vadd.f32 %v1476, %v1544
  %v1546 = vpop.f32.mrf.mxu0
  %v1547 = vadd.f32 %v1478, %v1546
  %1548 = vmatmul.bf16.gmra.mxu0 %v1133
  %v1549 = vpop.f32.mrf.mxu0
  %v1550 = vadd.f32 %v1481, %v1549
  %v1551 = vpop.f32.mrf.mxu0
  %v1552 = vadd.f32 %v1483, %v1551
  %1553 = vmatmul.bf16.gmra.mxu0 %v1145
  %v1554 = vpop.f32.mrf.mxu0
  %v1555 = vadd.f32 %v1486, %v1554
  %v1556 = vpop.f32.mrf.mxu0
  %v1557 = vadd.f32 %v1488, %v1556
  %1558 = vmatmul.bf16.gmra.mxu0 %v1157
  %v1559 = vpop.f32.mrf.mxu0
  %v1560 = vadd.f32 %v1491, %v1559
  %v1561 = vpop.f32.mrf.mxu0
  %v1562 = vadd.f32 %v1493, %v1561
  %1563 = vmatmul.bf16.gmra.mxu0 %v1169
  %v1564 = vpop.f32.mrf.mxu0
  %v1565 = vadd.f32 %v1496, %v1564
  %v1566 = vpop.f32.mrf.mxu0
  %v1567 = vadd.f32 %v1498, %v1566
  %1568 = vmatmul.bf16.gmra.mxu0 %v1181
  %v1569 = vpop.f32.mrf.mxu0
  %v1570 = vadd.f32 %v1501, %v1569
  %v1571 = vpop.f32.mrf.mxu0
  %v1572 = vadd.f32 %v1503, %v1571
  %1573 = vmatmul.bf16.gmra.mxu0 %v1193
  %v1574 = vpop.f32.mrf.mxu0
  %v1575 = vadd.f32 %v1506, %v1574
  %v1576 = vpop.f32.mrf.mxu0
  %v1577 = vadd.f32 %v1508, %v1576
  %1578 = vdwg.mxu0
  %1579 = vmatpush.bf16.msra.mxu0 %v421
  %1580 = vmatpush.bf16.msra.mxu0 %v420
  %1581 = vmatpush.bf16.msra.mxu0 %v419
  %1582 = vmatpush.bf16.msra.mxu0 %v418
  %1583 = vmatpush.bf16.msra.mxu0 %v417
  %1584 = vmatpush.bf16.msra.mxu0 %v416
  %1585 = vmatpush.bf16.msra.mxu0 %v415
  %1586 = vmatpush.bf16.msra.mxu0 %v414
  %1587 = vmatmul.bf16.gmra.mxu0 %v1062
  %v1588 = vpop.f32.mrf.mxu0
  %v1589 = vadd.f32 %v1520, %v1588
  %v1590 = vpop.f32.mrf.mxu0
  %v1591 = vadd.f32 %v1522, %v1590
  %1592 = vmatmul.bf16.gmra.mxu0 %v1074
  %v1593 = vpop.f32.mrf.mxu0
  %v1594 = vadd.f32 %v1525, %v1593
  %v1595 = vpop.f32.mrf.mxu0
  %v1596 = vadd.f32 %v1527, %v1595
  %1597 = vmatmul.bf16.gmra.mxu0 %v1086
  %v1598 = vpop.f32.mrf.mxu0
  %v1599 = vadd.f32 %v1530, %v1598
  %v1600 = vpop.f32.mrf.mxu0
  %v1601 = vadd.f32 %v1532, %v1600
  %1602 = vmatmul.bf16.gmra.mxu0 %v1098
  %v1603 = vpop.f32.mrf.mxu0
  %v1604 = vadd.f32 %v1535, %v1603
  %v1605 = vpop.f32.mrf.mxu0
  %v1606 = vadd.f32 %v1537, %v1605
  %1607 = vmatmul.bf16.gmra.mxu0 %v1110
  %v1608 = vpop.f32.mrf.mxu0
  %v1609 = vadd.f32 %v1540, %v1608
  %v1610 = vpop.f32.mrf.mxu0
  %v1611 = vadd.f32 %v1542, %v1610
  %1612 = vmatmul.bf16.gmra.mxu0 %v1122
  %v1613 = vpop.f32.mrf.mxu0
  %v1614 = vadd.f32 %v1545, %v1613
  %v1615 = vpop.f32.mrf.mxu0
  %v1616 = vadd.f32 %v1547, %v1615
  %1617 = vmatmul.bf16.gmra.mxu0 %v1134
  %v1618 = vpop.f32.mrf.mxu0
  %v1619 = vadd.f32 %v1550, %v1618
  %v1620 = vpop.f32.mrf.mxu0
  %v1621 = vadd.f32 %v1552, %v1620
  %1622 = vmatmul.bf16.gmra.mxu0 %v1146
  %v1623 = vpop.f32.mrf.mxu0
  %v1624 = vadd.f32 %v1555, %v1623
  %v1625 = vpop.f32.mrf.mxu0
  %v1626 = vadd.f32 %v1557, %v1625
  %1627 = vmatmul.bf16.gmra.mxu0 %v1158
  %v1628 = vpop.f32.mrf.mxu0
  %v1629 = vadd.f32 %v1560, %v1628
  %v1630 = vpop.f32.mrf.mxu0
  %v1631 = vadd.f32 %v1562, %v1630
  %1632 = vmatmul.bf16.gmra.mxu0 %v1170
  %v1633 = vpop.f32.mrf.mxu0
  %v1634 = vadd.f32 %v1565, %v1633
  %v1635 = vpop.f32.mrf.mxu0
  %v1636 = vadd.f32 %v1567, %v1635
  %1637 = vmatmul.bf16.gmra.mxu0 %v1182
  %v1638 = vpop.f32.mrf.mxu0
  %v1639 = vadd.f32 %v1570, %v1638
  %v1640 = vpop.f32.mrf.mxu0
  %v1641 = vadd.f32 %v1572, %v1640
  %1642 = vmatmul.bf16.gmra.mxu0 %v1194
  %v1643 = vpop.f32.mrf.mxu0
  %v1644 = vadd.f32 %v1575, %v1643
  %v1645 = vpop.f32.mrf.mxu0
  %v1646 = vadd.f32 %v1577, %v1645
  %1647 = vdwg.mxu0
  %1648 = vmatpush.bf16.msra.mxu0 %v429
  %1649 = vmatpush.bf16.msra.mxu0 %v428
  %1650 = vmatpush.bf16.msra.mxu0 %v427
  %1651 = vmatpush.bf16.msra.mxu0 %v426
  %1652 = vmatpush.bf16.msra.mxu0 %v425
  %1653 = vmatpush.bf16.msra.mxu0 %v424
  %1654 = vmatpush.bf16.msra.mxu0 %v423
  %1655 = vmatpush.bf16.msra.mxu0 %v422
  %1656 = vmatmul.bf16.gmra.mxu0 %v1063
  %v1657 = vpop.f32.mrf.mxu0
  %v1658 = vadd.f32 %v1589, %v1657
  %v1659 = vpop.f32.mrf.mxu0
  %v1660 = vadd.f32 %v1591, %v1659
  %1661 = vmatmul.bf16.gmra.mxu0 %v1075
  %v1662 = vpop.f32.mrf.mxu0
  %v1663 = vadd.f32 %v1594, %v1662
  %v1664 = vpop.f32.mrf.mxu0
  %v1665 = vadd.f32 %v1596, %v1664
  %1666 = vmatmul.bf16.gmra.mxu0 %v1087
  %v1667 = vpop.f32.mrf.mxu0
  %v1668 = vadd.f32 %v1599, %v1667
  %v1669 = vpop.f32.mrf.mxu0
  %v1670 = vadd.f32 %v1601, %v1669
  %1671 = vmatmul.bf16.gmra.mxu0 %v1099
  %v1672 = vpop.f32.mrf.mxu0
  %v1673 = vadd.f32 %v1604, %v1672
  %v1674 = vpop.f32.mrf.mxu0
  %v1675 = vadd.f32 %v1606, %v1674
  %1676 = vmatmul.bf16.gmra.mxu0 %v1111
  %v1677 = vpop.f32.mrf.mxu0
  %v1678 = vadd.f32 %v1609, %v1677
  %v1679 = vpop.f32.mrf.mxu0
  %v1680 = vadd.f32 %v1611, %v1679
  %1681 = vmatmul.bf16.gmra.mxu0 %v1123
  %v1682 = vpop.f32.mrf.mxu0
  %v1683 = vadd.f32 %v1614, %v1682
  %v1684 = vpop.f32.mrf.mxu0
  %v1685 = vadd.f32 %v1616, %v1684
  %1686 = vmatmul.bf16.gmra.mxu0 %v1135
  %v1687 = vpop.f32.mrf.mxu0
  %v1688 = vadd.f32 %v1619, %v1687
  %v1689 = vpop.f32.mrf.mxu0
  %v1690 = vadd.f32 %v1621, %v1689
  %1691 = vmatmul.bf16.gmra.mxu0 %v1147
  %v1692 = vpop.f32.mrf.mxu0
  %v1693 = vadd.f32 %v1624, %v1692
  %v1694 = vpop.f32.mrf.mxu0
  %v1695 = vadd.f32 %v1626, %v1694
  %1696 = vmatmul.bf16.gmra.mxu0 %v1159
  %v1697 = vpop.f32.mrf.mxu0
  %v1698 = vadd.f32 %v1629, %v1697
  %v1699 = vpop.f32.mrf.mxu0
  %v1700 = vadd.f32 %v1631, %v1699
  %1701 = vmatmul.bf16.gmra.mxu0 %v1171
  %v1702 = vpop.f32.mrf.mxu0
  %v1703 = vadd.f32 %v1634, %v1702
  %v1704 = vpop.f32.mrf.mxu0
  %v1705 = vadd.f32 %v1636, %v1704
  %1706 = vmatmul.bf16.gmra.mxu0 %v1183
  %v1707 = vpop.f32.mrf.mxu0
  %v1708 = vadd.f32 %v1639, %v1707
  %v1709 = vpop.f32.mrf.mxu0
  %v1710 = vadd.f32 %v1641, %v1709
  %1711 = vmatmul.bf16.gmra.mxu0 %v1195
  %v1712 = vpop.f32.mrf.mxu0
  %v1713 = vadd.f32 %v1644, %v1712
  %v1714 = vpop.f32.mrf.mxu0
  %v1715 = vadd.f32 %v1646, %v1714
  %1716 = vdwg.mxu0
  %1717 = vmatpush.bf16.msra.mxu0 %v437
  %1718 = vmatpush.bf16.msra.mxu0 %v436
  %1719 = vmatpush.bf16.msra.mxu0 %v435
  %1720 = vmatpush.bf16.msra.mxu0 %v434
  %1721 = vmatpush.bf16.msra.mxu0 %v433
  %1722 = vmatpush.bf16.msra.mxu0 %v432
  %1723 = vmatpush.bf16.msra.mxu0 %v431
  %1724 = vmatpush.bf16.msra.mxu0 %v430
  %1725 = vmatmul.bf16.gmra.mxu0 %v1064
  %v1726 = vpop.f32.mrf.mxu0
  %v1727 = vadd.f32 %v1658, %v1726
  %v1728 = vpop.f32.mrf.mxu0
  %v1729 = vadd.f32 %v1660, %v1728
  %1730 = vmatmul.bf16.gmra.mxu0 %v1076
  %v1731 = vpop.f32.mrf.mxu0
  %v1732 = vadd.f32 %v1663, %v1731
  %v1733 = vpop.f32.mrf.mxu0
  %v1734 = vadd.f32 %v1665, %v1733
  %1735 = vmatmul.bf16.gmra.mxu0 %v1088
  %v1736 = vpop.f32.mrf.mxu0
  %v1737 = vadd.f32 %v1668, %v1736
  %v1738 = vpop.f32.mrf.mxu0
  %v1739 = vadd.f32 %v1670, %v1738
  %1740 = vmatmul.bf16.gmra.mxu0 %v1100
  %v1741 = vpop.f32.mrf.mxu0
  %v1742 = vadd.f32 %v1673, %v1741
  %v1743 = vpop.f32.mrf.mxu0
  %v1744 = vadd.f32 %v1675, %v1743
  %1745 = vmatmul.bf16.gmra.mxu0 %v1112
  %v1746 = vpop.f32.mrf.mxu0
  %v1747 = vadd.f32 %v1678, %v1746
  %v1748 = vpop.f32.mrf.mxu0
  %v1749 = vadd.f32 %v1680, %v1748
  %1750 = vmatmul.bf16.gmra.mxu0 %v1124
  %v1751 = vpop.f32.mrf.mxu0
  %v1752 = vadd.f32 %v1683, %v1751
  %v1753 = vpop.f32.mrf.mxu0
  %v1754 = vadd.f32 %v1685, %v1753
  %1755 = vmatmul.bf16.gmra.mxu0 %v1136
  %v1756 = vpop.f32.mrf.mxu0
  %v1757 = vadd.f32 %v1688, %v1756
  %v1758 = vpop.f32.mrf.mxu0
  %v1759 = vadd.f32 %v1690, %v1758
  %1760 = vmatmul.bf16.gmra.mxu0 %v1148
  %v1761 = vpop.f32.mrf.mxu0
  %v1762 = vadd.f32 %v1693, %v1761
  %v1763 = vpop.f32.mrf.mxu0
  %v1764 = vadd.f32 %v1695, %v1763
  %1765 = vmatmul.bf16.gmra.mxu0 %v1160
  %v1766 = vpop.f32.mrf.mxu0
  %v1767 = vadd.f32 %v1698, %v1766
  %v1768 = vpop.f32.mrf.mxu0
  %v1769 = vadd.f32 %v1700, %v1768
  %1770 = vmatmul.bf16.gmra.mxu0 %v1172
  %v1771 = vpop.f32.mrf.mxu0
  %v1772 = vadd.f32 %v1703, %v1771
  %v1773 = vpop.f32.mrf.mxu0
  %v1774 = vadd.f32 %v1705, %v1773
  %1775 = vmatmul.bf16.gmra.mxu0 %v1184
  %v1776 = vpop.f32.mrf.mxu0
  %v1777 = vadd.f32 %v1708, %v1776
  %v1778 = vpop.f32.mrf.mxu0
  %v1779 = vadd.f32 %v1710, %v1778
  %1780 = vmatmul.bf16.gmra.mxu0 %v1196
  %v1781 = vpop.f32.mrf.mxu0
  %v1782 = vadd.f32 %v1713, %v1781
  %v1783 = vpop.f32.mrf.mxu0
  %v1784 = vadd.f32 %v1715, %v1783
  %1785 = vdwg.mxu0
  %1786 = vmatpush.bf16.msra.mxu0 %v445
  %1787 = vmatpush.bf16.msra.mxu0 %v444
  %1788 = vmatpush.bf16.msra.mxu0 %v443
  %1789 = vmatpush.bf16.msra.mxu0 %v442
  %1790 = vmatpush.bf16.msra.mxu0 %v441
  %1791 = vmatpush.bf16.msra.mxu0 %v440
  %1792 = vmatpush.bf16.msra.mxu0 %v439
  %1793 = vmatpush.bf16.msra.mxu0 %v438
  %1794 = vmatmul.bf16.gmra.mxu0 %v1065
  %v1795 = vpop.f32.mrf.mxu0
  %v1796 = vadd.f32 %v1727, %v1795
  %v1797 = vpop.f32.mrf.mxu0
  %v1798 = vadd.f32 %v1729, %v1797
  %1799 = vmatmul.bf16.gmra.mxu0 %v1077
  %v1800 = vpop.f32.mrf.mxu0
  %v1801 = vadd.f32 %v1732, %v1800
  %v1802 = vpop.f32.mrf.mxu0
  %v1803 = vadd.f32 %v1734, %v1802
  %1804 = vmatmul.bf16.gmra.mxu0 %v1089
  %v1805 = vpop.f32.mrf.mxu0
  %v1806 = vadd.f32 %v1737, %v1805
  %v1807 = vpop.f32.mrf.mxu0
  %v1808 = vadd.f32 %v1739, %v1807
  %1809 = vmatmul.bf16.gmra.mxu0 %v1101
  %v1810 = vpop.f32.mrf.mxu0
  %v1811 = vadd.f32 %v1742, %v1810
  %v1812 = vpop.f32.mrf.mxu0
  %v1813 = vadd.f32 %v1744, %v1812
  %1814 = vmatmul.bf16.gmra.mxu0 %v1113
  %v1815 = vpop.f32.mrf.mxu0
  %v1816 = vadd.f32 %v1747, %v1815
  %v1817 = vpop.f32.mrf.mxu0
  %v1818 = vadd.f32 %v1749, %v1817
  %1819 = vmatmul.bf16.gmra.mxu0 %v1125
  %v1820 = vpop.f32.mrf.mxu0
  %v1821 = vadd.f32 %v1752, %v1820
  %v1822 = vpop.f32.mrf.mxu0
  %v1823 = vadd.f32 %v1754, %v1822
  %1824 = vmatmul.bf16.gmra.mxu0 %v1137
  %v1825 = vpop.f32.mrf.mxu0
  %v1826 = vadd.f32 %v1757, %v1825
  %v1827 = vpop.f32.mrf.mxu0
  %v1828 = vadd.f32 %v1759, %v1827
  %1829 = vmatmul.bf16.gmra.mxu0 %v1149
  %v1830 = vpop.f32.mrf.mxu0
  %v1831 = vadd.f32 %v1762, %v1830
  %v1832 = vpop.f32.mrf.mxu0
  %v1833 = vadd.f32 %v1764, %v1832
  %1834 = vmatmul.bf16.gmra.mxu0 %v1161
  %v1835 = vpop.f32.mrf.mxu0
  %v1836 = vadd.f32 %v1767, %v1835
  %v1837 = vpop.f32.mrf.mxu0
  %v1838 = vadd.f32 %v1769, %v1837
  %1839 = vmatmul.bf16.gmra.mxu0 %v1173
  %v1840 = vpop.f32.mrf.mxu0
  %v1841 = vadd.f32 %v1772, %v1840
  %v1842 = vpop.f32.mrf.mxu0
  %v1843 = vadd.f32 %v1774, %v1842
  %1844 = vmatmul.bf16.gmra.mxu0 %v1185
  %v1845 = vpop.f32.mrf.mxu0
  %v1846 = vadd.f32 %v1777, %v1845
  %v1847 = vpop.f32.mrf.mxu0
  %v1848 = vadd.f32 %v1779, %v1847
  %1849 = vmatmul.bf16.gmra.mxu0 %v1197
  %v1850 = vpop.f32.mrf.mxu0
  %v1851 = vadd.f32 %v1782, %v1850
  %v1852 = vpop.f32.mrf.mxu0
  %v1853 = vadd.f32 %v1784, %v1852
  %1854 = vdwg.mxu0
  %1855 = vmatpush.bf16.msra.mxu0 %v453
  %1856 = vmatpush.bf16.msra.mxu0 %v452
  %1857 = vmatpush.bf16.msra.mxu0 %v451
  %1858 = vmatpush.bf16.msra.mxu0 %v450
  %1859 = vmatpush.bf16.msra.mxu0 %v449
  %1860 = vmatpush.bf16.msra.mxu0 %v448
  %1861 = vmatpush.bf16.msra.mxu0 %v447
  %1862 = vmatpush.bf16.msra.mxu0 %v446
  %1863 = vmatmul.bf16.gmra.mxu0 %v1066
  %v1864 = vpop.f32.mrf.mxu0
  %v1865 = vadd.f32 %v1796, %v1864
  %v1866 = vpop.f32.mrf.mxu0
  %v1867 = vadd.f32 %v1798, %v1866
  %1868 = vmatmul.bf16.gmra.mxu0 %v1078
  %v1869 = vpop.f32.mrf.mxu0
  %v1870 = vadd.f32 %v1801, %v1869
  %v1871 = vpop.f32.mrf.mxu0
  %v1872 = vadd.f32 %v1803, %v1871
  %1873 = vmatmul.bf16.gmra.mxu0 %v1090
  %v1874 = vpop.f32.mrf.mxu0
  %v1875 = vadd.f32 %v1806, %v1874
  %v1876 = vpop.f32.mrf.mxu0
  %v1877 = vadd.f32 %v1808, %v1876
  %1878 = vmatmul.bf16.gmra.mxu0 %v1102
  %v1879 = vpop.f32.mrf.mxu0
  %v1880 = vadd.f32 %v1811, %v1879
  %v1881 = vpop.f32.mrf.mxu0
  %v1882 = vadd.f32 %v1813, %v1881
  %1883 = vmatmul.bf16.gmra.mxu0 %v1114
  %v1884 = vpop.f32.mrf.mxu0
  %v1885 = vadd.f32 %v1816, %v1884
  %v1886 = vpop.f32.mrf.mxu0
  %v1887 = vadd.f32 %v1818, %v1886
  %1888 = vmatmul.bf16.gmra.mxu0 %v1126
  %v1889 = vpop.f32.mrf.mxu0
  %v1890 = vadd.f32 %v1821, %v1889
  %v1891 = vpop.f32.mrf.mxu0
  %v1892 = vadd.f32 %v1823, %v1891
  %1893 = vmatmul.bf16.gmra.mxu0 %v1138
  %v1894 = vpop.f32.mrf.mxu0
  %v1895 = vadd.f32 %v1826, %v1894
  %v1896 = vpop.f32.mrf.mxu0
  %v1897 = vadd.f32 %v1828, %v1896
  %1898 = vmatmul.bf16.gmra.mxu0 %v1150
  %v1899 = vpop.f32.mrf.mxu0
  %v1900 = vadd.f32 %v1831, %v1899
  %v1901 = vpop.f32.mrf.mxu0
  %v1902 = vadd.f32 %v1833, %v1901
  %1903 = vmatmul.bf16.gmra.mxu0 %v1162
  %v1904 = vpop.f32.mrf.mxu0
  %v1905 = vadd.f32 %v1836, %v1904
  %v1906 = vpop.f32.mrf.mxu0
  %v1907 = vadd.f32 %v1838, %v1906
  %1908 = vmatmul.bf16.gmra.mxu0 %v1174
  %v1909 = vpop.f32.mrf.mxu0
  %v1910 = vadd.f32 %v1841, %v1909
  %v1911 = vpop.f32.mrf.mxu0
  %v1912 = vadd.f32 %v1843, %v1911
  %1913 = vmatmul.bf16.gmra.mxu0 %v1186
  %v1914 = vpop.f32.mrf.mxu0
  %v1915 = vadd.f32 %v1846, %v1914
  %v1916 = vpop.f32.mrf.mxu0
  %v1917 = vadd.f32 %v1848, %v1916
  %1918 = vmatmul.bf16.gmra.mxu0 %v1198
  %v1919 = vpop.f32.mrf.mxu0
  %v1920 = vadd.f32 %v1851, %v1919
  %v1921 = vpop.f32.mrf.mxu0
  %v1922 = vadd.f32 %v1853, %v1921
  %1923 = vdwg.mxu0
  %1924 = vmatpush.bf16.msra.mxu0 %v461
  %1925 = vmatpush.bf16.msra.mxu0 %v460
  %1926 = vmatpush.bf16.msra.mxu0 %v459
  %1927 = vmatpush.bf16.msra.mxu0 %v458
  %1928 = vmatpush.bf16.msra.mxu0 %v457
  %1929 = vmatpush.bf16.msra.mxu0 %v456
  %1930 = vmatpush.bf16.msra.mxu0 %v455
  %1931 = vmatpush.bf16.msra.mxu0 %v454
  %1932 = vmatmul.bf16.gmra.mxu0 %v1067
  %v1933 = vpop.f32.mrf.mxu0
  %v1934 = vadd.f32 %v1865, %v1933
  %v1935 = vpop.f32.mrf.mxu0
  %v1936 = vadd.f32 %v1867, %v1935
  %1937 = vmatmul.bf16.gmra.mxu0 %v1079
  %v1938 = vpop.f32.mrf.mxu0
  %v1939 = vadd.f32 %v1870, %v1938
  %v1940 = vpop.f32.mrf.mxu0
  %v1941 = vadd.f32 %v1872, %v1940
  %1942 = vmatmul.bf16.gmra.mxu0 %v1091
  %v1943 = vpop.f32.mrf.mxu0
  %v1944 = vadd.f32 %v1875, %v1943
  %v1945 = vpop.f32.mrf.mxu0
  %v1946 = vadd.f32 %v1877, %v1945
  %1947 = vmatmul.bf16.gmra.mxu0 %v1103
  %v1948 = vpop.f32.mrf.mxu0
  %v1949 = vadd.f32 %v1880, %v1948
  %v1950 = vpop.f32.mrf.mxu0
  %v1951 = vadd.f32 %v1882, %v1950
  %1952 = vmatmul.bf16.gmra.mxu0 %v1115
  %v1953 = vpop.f32.mrf.mxu0
  %v1954 = vadd.f32 %v1885, %v1953
  %v1955 = vpop.f32.mrf.mxu0
  %v1956 = vadd.f32 %v1887, %v1955
  %1957 = vmatmul.bf16.gmra.mxu0 %v1127
  %v1958 = vpop.f32.mrf.mxu0
  %v1959 = vadd.f32 %v1890, %v1958
  %v1960 = vpop.f32.mrf.mxu0
  %v1961 = vadd.f32 %v1892, %v1960
  %1962 = vmatmul.bf16.gmra.mxu0 %v1139
  %v1963 = vpop.f32.mrf.mxu0
  %v1964 = vadd.f32 %v1895, %v1963
  %v1965 = vpop.f32.mrf.mxu0
  %v1966 = vadd.f32 %v1897, %v1965
  %1967 = vmatmul.bf16.gmra.mxu0 %v1151
  %v1968 = vpop.f32.mrf.mxu0
  %v1969 = vadd.f32 %v1900, %v1968
  %v1970 = vpop.f32.mrf.mxu0
  %v1971 = vadd.f32 %v1902, %v1970
  %1972 = vmatmul.bf16.gmra.mxu0 %v1163
  %v1973 = vpop.f32.mrf.mxu0
  %v1974 = vadd.f32 %v1905, %v1973
  %v1975 = vpop.f32.mrf.mxu0
  %v1976 = vadd.f32 %v1907, %v1975
  %1977 = vmatmul.bf16.gmra.mxu0 %v1175
  %v1978 = vpop.f32.mrf.mxu0
  %v1979 = vadd.f32 %v1910, %v1978
  %v1980 = vpop.f32.mrf.mxu0
  %v1981 = vadd.f32 %v1912, %v1980
  %1982 = vmatmul.bf16.gmra.mxu0 %v1187
  %v1983 = vpop.f32.mrf.mxu0
  %v1984 = vadd.f32 %v1915, %v1983
  %v1985 = vpop.f32.mrf.mxu0
  %v1986 = vadd.f32 %v1917, %v1985
  %1987 = vmatmul.bf16.gmra.mxu0 %v1199
  %v1988 = vpop.f32.mrf.mxu0
  %v1989 = vadd.f32 %v1920, %v1988
  %v1990 = vpop.f32.mrf.mxu0
  %v1991 = vadd.f32 %v1922, %v1990
  %1992 = vdwg.mxu0
  %1993 = vmatpush.bf16.msra.mxu0 %v469
  %1994 = vmatpush.bf16.msra.mxu0 %v468
  %1995 = vmatpush.bf16.msra.mxu0 %v467
  %1996 = vmatpush.bf16.msra.mxu0 %v466
  %1997 = vmatpush.bf16.msra.mxu0 %v465
  %1998 = vmatpush.bf16.msra.mxu0 %v464
  %1999 = vmatpush.bf16.msra.mxu0 %v463
  %2000 = vmatpush.bf16.msra.mxu0 %v462
  %2001 = vmatmul.bf16.gmra.mxu0 %v1068
  %v2002 = vpop.f32.mrf.mxu0
  %v2003 = vadd.f32 %v1934, %v2002
  %v2004 = vpop.f32.mrf.mxu0
  %v2005 = vadd.f32 %v1936, %v2004
  %2006 = vmatmul.bf16.gmra.mxu0 %v1080
  %v2007 = vpop.f32.mrf.mxu0
  %v2008 = vadd.f32 %v1939, %v2007
  %v2009 = vpop.f32.mrf.mxu0
  %v2010 = vadd.f32 %v1941, %v2009
  %2011 = vmatmul.bf16.gmra.mxu0 %v1092
  %v2012 = vpop.f32.mrf.mxu0
  %v2013 = vadd.f32 %v1944, %v2012
  %v2014 = vpop.f32.mrf.mxu0
  %v2015 = vadd.f32 %v1946, %v2014
  %2016 = vmatmul.bf16.gmra.mxu0 %v1104
  %v2017 = vpop.f32.mrf.mxu0
  %v2018 = vadd.f32 %v1949, %v2017
  %v2019 = vpop.f32.mrf.mxu0
  %v2020 = vadd.f32 %v1951, %v2019
  %2021 = vmatmul.bf16.gmra.mxu0 %v1116
  %v2022 = vpop.f32.mrf.mxu0
  %v2023 = vadd.f32 %v1954, %v2022
  %v2024 = vpop.f32.mrf.mxu0
  %v2025 = vadd.f32 %v1956, %v2024
  %2026 = vmatmul.bf16.gmra.mxu0 %v1128
  %v2027 = vpop.f32.mrf.mxu0
  %v2028 = vadd.f32 %v1959, %v2027
  %v2029 = vpop.f32.mrf.mxu0
  %v2030 = vadd.f32 %v1961, %v2029
  %2031 = vmatmul.bf16.gmra.mxu0 %v1140
  %v2032 = vpop.f32.mrf.mxu0
  %v2033 = vadd.f32 %v1964, %v2032
  %v2034 = vpop.f32.mrf.mxu0
  %v2035 = vadd.f32 %v1966, %v2034
  %2036 = vmatmul.bf16.gmra.mxu0 %v1152
  %v2037 = vpop.f32.mrf.mxu0
  %v2038 = vadd.f32 %v1969, %v2037
  %v2039 = vpop.f32.mrf.mxu0
  %v2040 = vadd.f32 %v1971, %v2039
  %2041 = vmatmul.bf16.gmra.mxu0 %v1164
  %v2042 = vpop.f32.mrf.mxu0
  %v2043 = vadd.f32 %v1974, %v2042
  %v2044 = vpop.f32.mrf.mxu0
  %v2045 = vadd.f32 %v1976, %v2044
  %2046 = vmatmul.bf16.gmra.mxu0 %v1176
  %v2047 = vpop.f32.mrf.mxu0
  %v2048 = vadd.f32 %v1979, %v2047
  %v2049 = vpop.f32.mrf.mxu0
  %v2050 = vadd.f32 %v1981, %v2049
  %2051 = vmatmul.bf16.gmra.mxu0 %v1188
  %v2052 = vpop.f32.mrf.mxu0
  %v2053 = vadd.f32 %v1984, %v2052
  %v2054 = vpop.f32.mrf.mxu0
  %v2055 = vadd.f32 %v1986, %v2054
  %2056 = vmatmul.bf16.gmra.mxu0 %v1200
  %v2057 = vpop.f32.mrf.mxu0
  %v2058 = vadd.f32 %v1989, %v2057
  %v2059 = vpop.f32.mrf.mxu0
  %v2060 = vadd.f32 %v1991, %v2059
  %2061 = vdwg.mxu0
  %2062 = vmatpush.bf16.msra.mxu0 %v477
  %2063 = vmatpush.bf16.msra.mxu0 %v476
  %2064 = vmatpush.bf16.msra.mxu0 %v475
  %2065 = vmatpush.bf16.msra.mxu0 %v474
  %2066 = vmatpush.bf16.msra.mxu0 %v473
  %2067 = vmatpush.bf16.msra.mxu0 %v472
  %2068 = vmatpush.bf16.msra.mxu0 %v471
  %2069 = vmatpush.bf16.msra.mxu0 %v470
  %2070 = vmatmul.bf16.gmra.mxu0 %v1069
  %v2071 = vpop.f32.mrf.mxu0
  %v2072 = vadd.f32 %v2003, %v2071
  %v2073 = vpop.f32.mrf.mxu0
  %v2074 = vadd.f32 %v2005, %v2073
  %2075 = vmatmul.bf16.gmra.mxu0 %v1081
  %v2076 = vpop.f32.mrf.mxu0
  %v2077 = vadd.f32 %v2008, %v2076
  %v2078 = vpop.f32.mrf.mxu0
  %v2079 = vadd.f32 %v2010, %v2078
  %2080 = vmatmul.bf16.gmra.mxu0 %v1093
  %v2081 = vpop.f32.mrf.mxu0
  %v2082 = vadd.f32 %v2013, %v2081
  %v2083 = vpop.f32.mrf.mxu0
  %v2084 = vadd.f32 %v2015, %v2083
  %2085 = vmatmul.bf16.gmra.mxu0 %v1105
  %v2086 = vpop.f32.mrf.mxu0
  %v2087 = vadd.f32 %v2018, %v2086
  %v2088 = vpop.f32.mrf.mxu0
  %v2089 = vadd.f32 %v2020, %v2088
  %2090 = vmatmul.bf16.gmra.mxu0 %v1117
  %v2091 = vpop.f32.mrf.mxu0
  %v2092 = vadd.f32 %v2023, %v2091
  %v2093 = vpop.f32.mrf.mxu0
  %v2094 = vadd.f32 %v2025, %v2093
  %2095 = vmatmul.bf16.gmra.mxu0 %v1129
  %v2096 = vpop.f32.mrf.mxu0
  %v2097 = vadd.f32 %v2028, %v2096
  %v2098 = vpop.f32.mrf.mxu0
  %v2099 = vadd.f32 %v2030, %v2098
  %2100 = vmatmul.bf16.gmra.mxu0 %v1141
  %v2101 = vpop.f32.mrf.mxu0
  %v2102 = vadd.f32 %v2033, %v2101
  %v2103 = vpop.f32.mrf.mxu0
  %v2104 = vadd.f32 %v2035, %v2103
  %2105 = vmatmul.bf16.gmra.mxu0 %v1153
  %v2106 = vpop.f32.mrf.mxu0
  %v2107 = vadd.f32 %v2038, %v2106
  %v2108 = vpop.f32.mrf.mxu0
  %v2109 = vadd.f32 %v2040, %v2108
  %2110 = vmatmul.bf16.gmra.mxu0 %v1165
  %v2111 = vpop.f32.mrf.mxu0
  %v2112 = vadd.f32 %v2043, %v2111
  %v2113 = vpop.f32.mrf.mxu0
  %v2114 = vadd.f32 %v2045, %v2113
  %2115 = vmatmul.bf16.gmra.mxu0 %v1177
  %v2116 = vpop.f32.mrf.mxu0
  %v2117 = vadd.f32 %v2048, %v2116
  %v2118 = vpop.f32.mrf.mxu0
  %v2119 = vadd.f32 %v2050, %v2118
  %2120 = vmatmul.bf16.gmra.mxu0 %v1189
  %v2121 = vpop.f32.mrf.mxu0
  %v2122 = vadd.f32 %v2053, %v2121
  %v2123 = vpop.f32.mrf.mxu0
  %v2124 = vadd.f32 %v2055, %v2123
  %2125 = vmatmul.bf16.gmra.mxu0 %v1201
  %v2126 = vpop.f32.mrf.mxu0
  %v2127 = vadd.f32 %v2058, %v2126
  %v2128 = vpop.f32.mrf.mxu0
  %v2129 = vadd.f32 %v2060, %v2128
  %2130 = vdwg.mxu0
  %2131 = vmatpush.bf16.msra.mxu0 0
  %2132 = vmatpush.bf16.msra.mxu0 0
  %2133 = vmatpush.bf16.msra.mxu0 0
  %2134 = vmatpush.bf16.msra.mxu0 %v482
  %2135 = vmatpush.bf16.msra.mxu0 %v481
  %2136 = vmatpush.bf16.msra.mxu0 %v480
  %2137 = vmatpush.bf16.msra.mxu0 %v479
  %2138 = vmatpush.bf16.msra.mxu0 %v478
  %2139 = vmatmul.bf16.gmra.mxu0 %v1337
  %v2140 = vpop.f32.mrf.mxu0
  %v2141 = vadd.f32 %v2072, %v2140
  %v2142 = vpop.f32.mrf.mxu0
  %v2143 = vadd.f32 %v2074, %v2142
  %2144 = vmatmul.bf16.gmra.mxu0 %v1340
  %v2145 = vpop.f32.mrf.mxu0
  %v2146 = vadd.f32 %v2077, %v2145
  %v2147 = vpop.f32.mrf.mxu0
  %v2148 = vadd.f32 %v2079, %v2147
  %2149 = vmatmul.bf16.gmra.mxu0 %v1343
  %v2150 = vpop.f32.mrf.mxu0
  %v2151 = vadd.f32 %v2082, %v2150
  %v2152 = vpop.f32.mrf.mxu0
  %v2153 = vadd.f32 %v2084, %v2152
  %2154 = vmatmul.bf16.gmra.mxu0 %v1346
  %v2155 = vpop.f32.mrf.mxu0
  %v2156 = vadd.f32 %v2087, %v2155
  %v2157 = vpop.f32.mrf.mxu0
  %v2158 = vadd.f32 %v2089, %v2157
  %2159 = vmatmul.bf16.gmra.mxu0 %v1349
  %v2160 = vpop.f32.mrf.mxu0
  %v2161 = vadd.f32 %v2092, %v2160
  %v2162 = vpop.f32.mrf.mxu0
  %v2163 = vadd.f32 %v2094, %v2162
  %2164 = vmatmul.bf16.gmra.mxu0 %v1352
  %v2165 = vpop.f32.mrf.mxu0
  %v2166 = vadd.f32 %v2097, %v2165
  %v2167 = vpop.f32.mrf.mxu0
  %v2168 = vadd.f32 %v2099, %v2167
  %2169 = vmatmul.bf16.gmra.mxu0 %v1355
  %v2170 = vpop.f32.mrf.mxu0
  %v2171 = vadd.f32 %v2102, %v2170
  %v2172 = vpop.f32.mrf.mxu0
  %v2173 = vadd.f32 %v2104, %v2172
  %2174 = vmatmul.bf16.gmra.mxu0 %v1358
  %v2175 = vpop.f32.mrf.mxu0
  %v2176 = vadd.f32 %v2107, %v2175
  %v2177 = vpop.f32.mrf.mxu0
  %v2178 = vadd.f32 %v2109, %v2177
  %2179 = vmatmul.bf16.gmra.mxu0 %v1361
  %v2180 = vpop.f32.mrf.mxu0
  %v2181 = vadd.f32 %v2112, %v2180
  %v2182 = vpop.f32.mrf.mxu0
  %v2183 = vadd.f32 %v2114, %v2182
  %2184 = vmatmul.bf16.gmra.mxu0 %v1364
  %v2185 = vpop.f32.mrf.mxu0
  %v2186 = vadd.f32 %v2117, %v2185
  %v2187 = vpop.f32.mrf.mxu0
  %v2188 = vadd.f32 %v2119, %v2187
  %2189 = vmatmul.bf16.gmra.mxu0 %v1367
  %v2190 = vpop.f32.mrf.mxu0
  %v2191 = vadd.f32 %v2122, %v2190
  %v2192 = vpop.f32.mrf.mxu0
  %v2193 = vadd.f32 %v2124, %v2192
  %2194 = vmatmul.bf16.gmra.mxu0 %v1370
  %v2195 = vpop.f32.mrf.mxu0
  %v2196 = vadd.f32 %v2127, %v2195
  %v2197 = vpop.f32.mrf.mxu0
  %v2198 = vadd.f32 %v2129, %v2197
  %2199 = vdwg.mxu0
  %vm2200 = vcmask 400384
  %v2201 = vsel %vm2200, %v2141, 0.0
  %2202 = vadd.xlane.f32.xlu0 %v2201
  %v2203 = vpop.xlane.xlu0 %2202
  %v2204 = vsel %vm2200, %v2143, 0.0
  %2205 = vadd.xlane.f32.xlu0 %v2204
  %v2206 = vpop.xlane.xlu0 %2205
  %v2207 = vsel %vm2200, %v2146, 0.0
  %2208 = vadd.xlane.f32.xlu0 %v2207
  %v2209 = vpop.xlane.xlu0 %2208
  %v2210 = vsel %vm2200, %v2148, 0.0
  %2211 = vadd.xlane.f32.xlu0 %v2210
  %v2212 = vpop.xlane.xlu0 %2211
  %v2213 = vsel %vm2200, %v2151, 0.0
  %2214 = vadd.xlane.f32.xlu0 %v2213
  %v2215 = vpop.xlane.xlu0 %2214
  %v2216 = vsel %vm2200, %v2153, 0.0
  %2217 = vadd.xlane.f32.xlu0 %v2216
  %v2218 = vpop.xlane.xlu0 %2217
  %v2219 = vsel %vm2200, %v2156, 0.0
  %2220 = vadd.xlane.f32.xlu0 %v2219
  %v2221 = vpop.xlane.xlu0 %2220
  %v2222 = vsel %vm2200, %v2158, 0.0
  %2223 = vadd.xlane.f32.xlu0 %v2222
  %v2224 = vpop.xlane.xlu0 %2223
  %v2225 = vsel %vm2200, %v2161, 0.0
  %2226 = vadd.xlane.f32.xlu0 %v2225
  %v2227 = vpop.xlane.xlu0 %2226
  %v2228 = vsel %vm2200, %v2163, 0.0
  %2229 = vadd.xlane.f32.xlu0 %v2228
  %v2230 = vpop.xlane.xlu0 %2229
  %v2231 = vsel %vm2200, %v2166, 0.0
  %2232 = vadd.xlane.f32.xlu0 %v2231
  %v2233 = vpop.xlane.xlu0 %2232
  %v2234 = vsel %vm2200, %v2168, 0.0
  %2235 = vadd.xlane.f32.xlu0 %v2234
  %v2236 = vpop.xlane.xlu0 %2235
  %v2237 = vsel %vm2200, %v2171, 0.0
  %2238 = vadd.xlane.f32.xlu0 %v2237
  %v2239 = vpop.xlane.xlu0 %2238
  %v2240 = vsel %vm2200, %v2173, 0.0
  %2241 = vadd.xlane.f32.xlu0 %v2240
  %v2242 = vpop.xlane.xlu0 %2241
  %v2243 = vsel %vm2200, %v2176, 0.0
  %2244 = vadd.xlane.f32.xlu0 %v2243
  %v2245 = vpop.xlane.xlu0 %2244
  %v2246 = vsel %vm2200, %v2178, 0.0
  %2247 = vadd.xlane.f32.xlu0 %v2246
  %v2248 = vpop.xlane.xlu0 %2247
  %v2249 = vsel %vm2200, %v2181, 0.0
  %2250 = vadd.xlane.f32.xlu0 %v2249
  %v2251 = vpop.xlane.xlu0 %2250
  %v2252 = vsel %vm2200, %v2183, 0.0
  %2253 = vadd.xlane.f32.xlu0 %v2252
  %v2254 = vpop.xlane.xlu0 %2253
  %v2255 = vsel %vm2200, %v2186, 0.0
  %2256 = vadd.xlane.f32.xlu0 %v2255
  %v2257 = vpop.xlane.xlu0 %2256
  %v2258 = vsel %vm2200, %v2188, 0.0
  %2259 = vadd.xlane.f32.xlu0 %v2258
  %v2260 = vpop.xlane.xlu0 %2259
  %v2261 = vsel %vm2200, %v2191, 0.0
  %2262 = vadd.xlane.f32.xlu0 %v2261
  %v2263 = vpop.xlane.xlu0 %2262
  %v2264 = vsel %vm2200, %v2193, 0.0
  %2265 = vadd.xlane.f32.xlu0 %v2264
  %v2266 = vpop.xlane.xlu0 %2265
  %v2267 = vsel %vm2200, %v2196, 0.0
  %2268 = vadd.xlane.f32.xlu0 %v2267
  %v2269 = vpop.xlane.xlu0 %2268
  %v2270 = vsel %vm2200, %v2198, 0.0
  %2271 = vadd.xlane.f32.xlu0 %v2270
  %v2272 = vpop.xlane.xlu0 %2271
  %v2273 = vmul.f32 %v2203, 0.020408163
  %v2274 = vmul.f32 %v2206, 0.020408163
  %v2275 = vmul.f32 %v2209, 0.020408163
  %v2276 = vmul.f32 %v2212, 0.020408163
  %v2277 = vmul.f32 %v2215, 0.020408163
  %v2278 = vmul.f32 %v2218, 0.020408163
  %v2279 = vmul.f32 %v2221, 0.020408163
  %v2280 = vmul.f32 %v2224, 0.020408163
  %v2281 = vmul.f32 %v2227, 0.020408163
  %v2282 = vmul.f32 %v2230, 0.020408163
  %v2283 = vmul.f32 %v2233, 0.020408163
  %v2284 = vmul.f32 %v2236, 0.020408163
  %v2285 = vmul.f32 %v2239, 0.020408163
  %v2286 = vmul.f32 %v2242, 0.020408163
  %v2287 = vmul.f32 %v2245, 0.020408163
  %v2288 = vmul.f32 %v2248, 0.020408163
  %v2289 = vmul.f32 %v2251, 0.020408163
  %v2290 = vmul.f32 %v2254, 0.020408163
  %v2291 = vmul.f32 %v2257, 0.020408163
  %v2292 = vmul.f32 %v2260, 0.020408163
  %v2293 = vmul.f32 %v2263, 0.020408163
  %v2294 = vmul.f32 %v2266, 0.020408163
  %v2295 = vmul.f32 %v2269, 0.020408163
  %v2296 = vmul.f32 %v2272, 0.020408163
  %v2297 = vsub.f32 %v2141, %v2273
  %v2298 = vsub.f32 %v2143, %v2274
  %v2299 = vsub.f32 %v2146, %v2275
  %v2300 = vsub.f32 %v2148, %v2276
  %v2301 = vsub.f32 %v2151, %v2277
  %v2302 = vsub.f32 %v2153, %v2278
  %v2303 = vsub.f32 %v2156, %v2279
  %v2304 = vsub.f32 %v2158, %v2280
  %v2305 = vsub.f32 %v2161, %v2281
  %v2306 = vsub.f32 %v2163, %v2282
  %v2307 = vsub.f32 %v2166, %v2283
  %v2308 = vsub.f32 %v2168, %v2284
  %v2309 = vsub.f32 %v2171, %v2285
  %v2310 = vsub.f32 %v2173, %v2286
  %v2311 = vsub.f32 %v2176, %v2287
  %v2312 = vsub.f32 %v2178, %v2288
  %v2313 = vsub.f32 %v2181, %v2289
  %v2314 = vsub.f32 %v2183, %v2290
  %v2315 = vsub.f32 %v2186, %v2291
  %v2316 = vsub.f32 %v2188, %v2292
  %v2317 = vsub.f32 %v2191, %v2293
  %v2318 = vsub.f32 %v2193, %v2294
  %v2319 = vsub.f32 %v2196, %v2295
  %v2320 = vsub.f32 %v2198, %v2296
  %v2321 = vmul.f32 %v2297, %v2297
  %v2322 = vmul.f32 %v2298, %v2298
  %v2323 = vmul.f32 %v2299, %v2299
  %v2324 = vmul.f32 %v2300, %v2300
  %v2325 = vmul.f32 %v2301, %v2301
  %v2326 = vmul.f32 %v2302, %v2302
  %v2327 = vmul.f32 %v2303, %v2303
  %v2328 = vmul.f32 %v2304, %v2304
  %v2329 = vmul.f32 %v2305, %v2305
  %v2330 = vmul.f32 %v2306, %v2306
  %v2331 = vmul.f32 %v2307, %v2307
  %v2332 = vmul.f32 %v2308, %v2308
  %v2333 = vmul.f32 %v2309, %v2309
  %v2334 = vmul.f32 %v2310, %v2310
  %v2335 = vmul.f32 %v2311, %v2311
  %v2336 = vmul.f32 %v2312, %v2312
  %v2337 = vmul.f32 %v2313, %v2313
  %v2338 = vmul.f32 %v2314, %v2314
  %v2339 = vmul.f32 %v2315, %v2315
  %v2340 = vmul.f32 %v2316, %v2316
  %v2341 = vmul.f32 %v2317, %v2317
  %v2342 = vmul.f32 %v2318, %v2318
  %v2343 = vmul.f32 %v2319, %v2319
  %v2344 = vmul.f32 %v2320, %v2320
  %v2345 = vsel %vm2200, %v2321, 0.0
  %2346 = vadd.xlane.f32.xlu0 %v2345
  %v2347 = vpop.xlane.xlu0 %2346
  %v2348 = vsel %vm2200, %v2322, 0.0
  %2349 = vadd.xlane.f32.xlu0 %v2348
  %v2350 = vpop.xlane.xlu0 %2349
  %v2351 = vsel %vm2200, %v2323, 0.0
  %2352 = vadd.xlane.f32.xlu0 %v2351
  %v2353 = vpop.xlane.xlu0 %2352
  %v2354 = vsel %vm2200, %v2324, 0.0
  %2355 = vadd.xlane.f32.xlu0 %v2354
  %v2356 = vpop.xlane.xlu0 %2355
  %v2357 = vsel %vm2200, %v2325, 0.0
  %2358 = vadd.xlane.f32.xlu0 %v2357
  %v2359 = vpop.xlane.xlu0 %2358
  %v2360 = vsel %vm2200, %v2326, 0.0
  %2361 = vadd.xlane.f32.xlu0 %v2360
  %v2362 = vpop.xlane.xlu0 %2361
  %v2363 = vsel %vm2200, %v2327, 0.0
  %2364 = vadd.xlane.f32.xlu0 %v2363
  %v2365 = vpop.xlane.xlu0 %2364
  %v2366 = vsel %vm2200, %v2328, 0.0
  %2367 = vadd.xlane.f32.xlu0 %v2366
  %v2368 = vpop.xlane.xlu0 %2367
  %v2369 = vsel %vm2200, %v2329, 0.0
  %2370 = vadd.xlane.f32.xlu0 %v2369
  %v2371 = vpop.xlane.xlu0 %2370
  %v2372 = vsel %vm2200, %v2330, 0.0
  %2373 = vadd.xlane.f32.xlu0 %v2372
  %v2374 = vpop.xlane.xlu0 %2373
  %v2375 = vsel %vm2200, %v2331, 0.0
  %2376 = vadd.xlane.f32.xlu0 %v2375
  %v2377 = vpop.xlane.xlu0 %2376
  %v2378 = vsel %vm2200, %v2332, 0.0
  %2379 = vadd.xlane.f32.xlu0 %v2378
  %v2380 = vpop.xlane.xlu0 %2379
  %v2381 = vsel %vm2200, %v2333, 0.0
  %2382 = vadd.xlane.f32.xlu0 %v2381
  %v2383 = vpop.xlane.xlu0 %2382
  %v2384 = vsel %vm2200, %v2334, 0.0
  %2385 = vadd.xlane.f32.xlu0 %v2384
  %v2386 = vpop.xlane.xlu0 %2385
  %v2387 = vsel %vm2200, %v2335, 0.0
  %2388 = vadd.xlane.f32.xlu0 %v2387
  %v2389 = vpop.xlane.xlu0 %2388
  %v2390 = vsel %vm2200, %v2336, 0.0
  %2391 = vadd.xlane.f32.xlu0 %v2390
  %v2392 = vpop.xlane.xlu0 %2391
  %v2393 = vsel %vm2200, %v2337, 0.0
  %2394 = vadd.xlane.f32.xlu0 %v2393
  %v2395 = vpop.xlane.xlu0 %2394
  %v2396 = vsel %vm2200, %v2338, 0.0
  %2397 = vadd.xlane.f32.xlu0 %v2396
  %v2398 = vpop.xlane.xlu0 %2397
  %v2399 = vsel %vm2200, %v2339, 0.0
  %2400 = vadd.xlane.f32.xlu0 %v2399
  %v2401 = vpop.xlane.xlu0 %2400
  %v2402 = vsel %vm2200, %v2340, 0.0
  %2403 = vadd.xlane.f32.xlu0 %v2402
  %v2404 = vpop.xlane.xlu0 %2403
  %v2405 = vsel %vm2200, %v2341, 0.0
  %2406 = vadd.xlane.f32.xlu0 %v2405
  %v2407 = vpop.xlane.xlu0 %2406
  %v2408 = vsel %vm2200, %v2342, 0.0
  %2409 = vadd.xlane.f32.xlu0 %v2408
  %v2410 = vpop.xlane.xlu0 %2409
  %v2411 = vsel %vm2200, %v2343, 0.0
  %2412 = vadd.xlane.f32.xlu0 %v2411
  %v2413 = vpop.xlane.xlu0 %2412
  %v2414 = vsel %vm2200, %v2344, 0.0
  %2415 = vadd.xlane.f32.xlu0 %v2414
  %v2416 = vpop.xlane.xlu0 %2415
  %v2417 = vmul.f32 %v2347, 0.020408163
  %v2418 = vmul.f32 %v2350, 0.020408163
  %v2419 = vmul.f32 %v2353, 0.020408163
  %v2420 = vmul.f32 %v2356, 0.020408163
  %v2421 = vmul.f32 %v2359, 0.020408163
  %v2422 = vmul.f32 %v2362, 0.020408163
  %v2423 = vmul.f32 %v2365, 0.020408163
  %v2424 = vmul.f32 %v2368, 0.020408163
  %v2425 = vmul.f32 %v2371, 0.020408163
  %v2426 = vmul.f32 %v2374, 0.020408163
  %v2427 = vmul.f32 %v2377, 0.020408163
  %v2428 = vmul.f32 %v2380, 0.020408163
  %v2429 = vmul.f32 %v2383, 0.020408163
  %v2430 = vmul.f32 %v2386, 0.020408163
  %v2431 = vmul.f32 %v2389, 0.020408163
  %v2432 = vmul.f32 %v2392, 0.020408163
  %v2433 = vmul.f32 %v2395, 0.020408163
  %v2434 = vmul.f32 %v2398, 0.020408163
  %v2435 = vmul.f32 %v2401, 0.020408163
  %v2436 = vmul.f32 %v2404, 0.020408163
  %v2437 = vmul.f32 %v2407, 0.020408163
  %v2438 = vmul.f32 %v2410, 0.020408163
  %v2439 = vmul.f32 %v2413, 0.020408163
  %v2440 = vmul.f32 %v2416, 0.020408163
  %v2441 = vld [vmem:[%s2] sm:$0xff]
  %v2442 = vld [vmem:[%s2 + $0x8] sm:$0xff]
  %v2443 = vld [vmem:[%s2 + $0x10] sm:$0xff]
  %v2444 = vld [vmem:[%s2 + $0x18] sm:$0xff]
  %v2445 = vld [vmem:[%s2 + $0x20] sm:$0xff]
  %v2446 = vld [vmem:[%s2 + $0x28] sm:$0xff]
  %v2447 = vld [vmem:[%s2 + $0x30] sm:$0xff]
  %v2448 = vld [vmem:[%s2 + $0x38] sm:$0xff]
  %v2449 = vld [vmem:[%s2 + $0x40] sm:$0xff]
  %v2450 = vld [vmem:[%s2 + $0x48] sm:$0xff]
  %v2451 = vld [vmem:[%s2 + $0x50] sm:$0xff]
  %v2452 = vld [vmem:[%s2 + $0x58] sm:$0xff]
  %v2453 = vld [vmem:[%s2 + $0x60] sm:$0xff]
  %v2454 = vld [vmem:[%s2 + $0x68] sm:$0xff]
  %v2455 = vld [vmem:[%s2 + $0x70] sm:$0xff]
  %v2456 = vld [vmem:[%s2 + $0x78] sm:$0xff]
  %v2457 = vld [vmem:[%s2 + $0x80] sm:$0xff]
  %v2458 = vld [vmem:[%s2 + $0x88] sm:$0xff]
  %v2459 = vld [vmem:[%s2 + $0x90] sm:$0xff]
  %v2460 = vld [vmem:[%s2 + $0x98] sm:$0xff]
  %v2461 = vld [vmem:[%s2 + $0xa0] sm:$0xff]
  %v2462 = vld [vmem:[%s2 + $0xa8] sm:$0xff]
  %v2463 = vld [vmem:[%s2 + $0xb0] sm:$0xff]
  %v2464 = vld [vmem:[%s2 + $0xb8] sm:$0xff]
  %v2465 = vadd.f32 %v2417, 1e-05
  %v2466 = vadd.f32 %v2418, 1e-05
  %v2467 = vadd.f32 %v2419, 1e-05
  %v2468 = vadd.f32 %v2420, 1e-05
  %v2469 = vadd.f32 %v2421, 1e-05
  %v2470 = vadd.f32 %v2422, 1e-05
  %v2471 = vadd.f32 %v2423, 1e-05
  %v2472 = vadd.f32 %v2424, 1e-05
  %v2473 = vadd.f32 %v2425, 1e-05
  %v2474 = vadd.f32 %v2426, 1e-05
  %v2475 = vadd.f32 %v2427, 1e-05
  %v2476 = vadd.f32 %v2428, 1e-05
  %v2477 = vadd.f32 %v2429, 1e-05
  %v2478 = vadd.f32 %v2430, 1e-05
  %v2479 = vadd.f32 %v2431, 1e-05
  %v2480 = vadd.f32 %v2432, 1e-05
  %v2481 = vadd.f32 %v2433, 1e-05
  %v2482 = vadd.f32 %v2434, 1e-05
  %v2483 = vadd.f32 %v2435, 1e-05
  %v2484 = vadd.f32 %v2436, 1e-05
  %v2485 = vadd.f32 %v2437, 1e-05
  %v2486 = vadd.f32 %v2438, 1e-05
  %v2487 = vadd.f32 %v2439, 1e-05
  %v2488 = vadd.f32 %v2440, 1e-05
  %v2489 = vrsqrt.pop %v2465
  %v2490 = vmul.f32 %v2489, %v2465
  %v2491 = vmul.f32 %v2490, %v2489
  %v2492 = vmul.f32 0.5, %v2491
  %v2493 = vsub.f32 1.5, %v2492
  %v2494 = vmul.f32 %v2489, %v2493
  %vm2495 = vweird.f32 %v2465
  %vm2496 = vweird.f32 %v2489
  %vm2497 = vmor %vm2495, %vm2496
  %v2498 = vsel %vm2497, %v2489, %v2494
  %v2499 = vrsqrt.pop %v2466
  %v2500 = vmul.f32 %v2499, %v2466
  %v2501 = vmul.f32 %v2500, %v2499
  %v2502 = vmul.f32 0.5, %v2501
  %v2503 = vsub.f32 1.5, %v2502
  %v2504 = vmul.f32 %v2499, %v2503
  %vm2505 = vweird.f32 %v2466
  %vm2506 = vweird.f32 %v2499
  %vm2507 = vmor %vm2505, %vm2506
  %v2508 = vsel %vm2507, %v2499, %v2504
  %v2509 = vrsqrt.pop %v2467
  %v2510 = vmul.f32 %v2509, %v2467
  %v2511 = vmul.f32 %v2510, %v2509
  %v2512 = vmul.f32 0.5, %v2511
  %v2513 = vsub.f32 1.5, %v2512
  %v2514 = vmul.f32 %v2509, %v2513
  %vm2515 = vweird.f32 %v2467
  %vm2516 = vweird.f32 %v2509
  %vm2517 = vmor %vm2515, %vm2516
  %v2518 = vsel %vm2517, %v2509, %v2514
  %v2519 = vrsqrt.pop %v2468
  %v2520 = vmul.f32 %v2519, %v2468
  %v2521 = vmul.f32 %v2520, %v2519
  %v2522 = vmul.f32 0.5, %v2521
  %v2523 = vsub.f32 1.5, %v2522
  %v2524 = vmul.f32 %v2519, %v2523
  %vm2525 = vweird.f32 %v2468
  %vm2526 = vweird.f32 %v2519
  %vm2527 = vmor %vm2525, %vm2526
  %v2528 = vsel %vm2527, %v2519, %v2524
  %v2529 = vrsqrt.pop %v2469
  %v2530 = vmul.f32 %v2529, %v2469
  %v2531 = vmul.f32 %v2530, %v2529
  %v2532 = vmul.f32 0.5, %v2531
  %v2533 = vsub.f32 1.5, %v2532
  %v2534 = vmul.f32 %v2529, %v2533
  %vm2535 = vweird.f32 %v2469
  %vm2536 = vweird.f32 %v2529
  %vm2537 = vmor %vm2535, %vm2536
  %v2538 = vsel %vm2537, %v2529, %v2534
  %v2539 = vrsqrt.pop %v2470
  %v2540 = vmul.f32 %v2539, %v2470
  %v2541 = vmul.f32 %v2540, %v2539
  %v2542 = vmul.f32 0.5, %v2541
  %v2543 = vsub.f32 1.5, %v2542
  %v2544 = vmul.f32 %v2539, %v2543
  %vm2545 = vweird.f32 %v2470
  %vm2546 = vweird.f32 %v2539
  %vm2547 = vmor %vm2545, %vm2546
  %v2548 = vsel %vm2547, %v2539, %v2544
  %v2549 = vrsqrt.pop %v2471
  %v2550 = vmul.f32 %v2549, %v2471
  %v2551 = vmul.f32 %v2550, %v2549
  %v2552 = vmul.f32 0.5, %v2551
  %v2553 = vsub.f32 1.5, %v2552
  %v2554 = vmul.f32 %v2549, %v2553
  %vm2555 = vweird.f32 %v2471
  %vm2556 = vweird.f32 %v2549
  %vm2557 = vmor %vm2555, %vm2556
  %v2558 = vsel %vm2557, %v2549, %v2554
  %v2559 = vrsqrt.pop %v2472
  %v2560 = vmul.f32 %v2559, %v2472
  %v2561 = vmul.f32 %v2560, %v2559
  %v2562 = vmul.f32 0.5, %v2561
  %v2563 = vsub.f32 1.5, %v2562
  %v2564 = vmul.f32 %v2559, %v2563
  %vm2565 = vweird.f32 %v2472
  %vm2566 = vweird.f32 %v2559
  %vm2567 = vmor %vm2565, %vm2566
  %v2568 = vsel %vm2567, %v2559, %v2564
  %v2569 = vrsqrt.pop %v2473
  %v2570 = vmul.f32 %v2569, %v2473
  %v2571 = vmul.f32 %v2570, %v2569
  %v2572 = vmul.f32 0.5, %v2571
  %v2573 = vsub.f32 1.5, %v2572
  %v2574 = vmul.f32 %v2569, %v2573
  %vm2575 = vweird.f32 %v2473
  %vm2576 = vweird.f32 %v2569
  %vm2577 = vmor %vm2575, %vm2576
  %v2578 = vsel %vm2577, %v2569, %v2574
  %v2579 = vrsqrt.pop %v2474
  %v2580 = vmul.f32 %v2579, %v2474
  %v2581 = vmul.f32 %v2580, %v2579
  %v2582 = vmul.f32 0.5, %v2581
  %v2583 = vsub.f32 1.5, %v2582
  %v2584 = vmul.f32 %v2579, %v2583
  %vm2585 = vweird.f32 %v2474
  %vm2586 = vweird.f32 %v2579
  %vm2587 = vmor %vm2585, %vm2586
  %v2588 = vsel %vm2587, %v2579, %v2584
  %v2589 = vrsqrt.pop %v2475
  %v2590 = vmul.f32 %v2589, %v2475
  %v2591 = vmul.f32 %v2590, %v2589
  %v2592 = vmul.f32 0.5, %v2591
  %v2593 = vsub.f32 1.5, %v2592
  %v2594 = vmul.f32 %v2589, %v2593
  %vm2595 = vweird.f32 %v2475
  %vm2596 = vweird.f32 %v2589
  %vm2597 = vmor %vm2595, %vm2596
  %v2598 = vsel %vm2597, %v2589, %v2594
  %v2599 = vrsqrt.pop %v2476
  %v2600 = vmul.f32 %v2599, %v2476
  %v2601 = vmul.f32 %v2600, %v2599
  %v2602 = vmul.f32 0.5, %v2601
  %v2603 = vsub.f32 1.5, %v2602
  %v2604 = vmul.f32 %v2599, %v2603
  %vm2605 = vweird.f32 %v2476
  %vm2606 = vweird.f32 %v2599
  %vm2607 = vmor %vm2605, %vm2606
  %v2608 = vsel %vm2607, %v2599, %v2604
  %v2609 = vrsqrt.pop %v2477
  %v2610 = vmul.f32 %v2609, %v2477
  %v2611 = vmul.f32 %v2610, %v2609
  %v2612 = vmul.f32 0.5, %v2611
  %v2613 = vsub.f32 1.5, %v2612
  %v2614 = vmul.f32 %v2609, %v2613
  %vm2615 = vweird.f32 %v2477
  %vm2616 = vweird.f32 %v2609
  %vm2617 = vmor %vm2615, %vm2616
  %v2618 = vsel %vm2617, %v2609, %v2614
  %v2619 = vrsqrt.pop %v2478
  %v2620 = vmul.f32 %v2619, %v2478
  %v2621 = vmul.f32 %v2620, %v2619
  %v2622 = vmul.f32 0.5, %v2621
  %v2623 = vsub.f32 1.5, %v2622
  %v2624 = vmul.f32 %v2619, %v2623
  %vm2625 = vweird.f32 %v2478
  %vm2626 = vweird.f32 %v2619
  %vm2627 = vmor %vm2625, %vm2626
  %v2628 = vsel %vm2627, %v2619, %v2624
  %v2629 = vrsqrt.pop %v2479
  %v2630 = vmul.f32 %v2629, %v2479
  %v2631 = vmul.f32 %v2630, %v2629
  %v2632 = vmul.f32 0.5, %v2631
  %v2633 = vsub.f32 1.5, %v2632
  %v2634 = vmul.f32 %v2629, %v2633
  %vm2635 = vweird.f32 %v2479
  %vm2636 = vweird.f32 %v2629
  %vm2637 = vmor %vm2635, %vm2636
  %v2638 = vsel %vm2637, %v2629, %v2634
  %v2639 = vrsqrt.pop %v2480
  %v2640 = vmul.f32 %v2639, %v2480
  %v2641 = vmul.f32 %v2640, %v2639
  %v2642 = vmul.f32 0.5, %v2641
  %v2643 = vsub.f32 1.5, %v2642
  %v2644 = vmul.f32 %v2639, %v2643
  %vm2645 = vweird.f32 %v2480
  %vm2646 = vweird.f32 %v2639
  %vm2647 = vmor %vm2645, %vm2646
  %v2648 = vsel %vm2647, %v2639, %v2644
  %v2649 = vrsqrt.pop %v2481
  %v2650 = vmul.f32 %v2649, %v2481
  %v2651 = vmul.f32 %v2650, %v2649
  %v2652 = vmul.f32 0.5, %v2651
  %v2653 = vsub.f32 1.5, %v2652
  %v2654 = vmul.f32 %v2649, %v2653
  %vm2655 = vweird.f32 %v2481
  %vm2656 = vweird.f32 %v2649
  %vm2657 = vmor %vm2655, %vm2656
  %v2658 = vsel %vm2657, %v2649, %v2654
  %v2659 = vrsqrt.pop %v2482
  %v2660 = vmul.f32 %v2659, %v2482
  %v2661 = vmul.f32 %v2660, %v2659
  %v2662 = vmul.f32 0.5, %v2661
  %v2663 = vsub.f32 1.5, %v2662
  %v2664 = vmul.f32 %v2659, %v2663
  %vm2665 = vweird.f32 %v2482
  %vm2666 = vweird.f32 %v2659
  %vm2667 = vmor %vm2665, %vm2666
  %v2668 = vsel %vm2667, %v2659, %v2664
  %v2669 = vrsqrt.pop %v2483
  %v2670 = vmul.f32 %v2669, %v2483
  %v2671 = vmul.f32 %v2670, %v2669
  %v2672 = vmul.f32 0.5, %v2671
  %v2673 = vsub.f32 1.5, %v2672
  %v2674 = vmul.f32 %v2669, %v2673
  %vm2675 = vweird.f32 %v2483
  %vm2676 = vweird.f32 %v2669
  %vm2677 = vmor %vm2675, %vm2676
  %v2678 = vsel %vm2677, %v2669, %v2674
  %v2679 = vrsqrt.pop %v2484
  %v2680 = vmul.f32 %v2679, %v2484
  %v2681 = vmul.f32 %v2680, %v2679
  %v2682 = vmul.f32 0.5, %v2681
  %v2683 = vsub.f32 1.5, %v2682
  %v2684 = vmul.f32 %v2679, %v2683
  %vm2685 = vweird.f32 %v2484
  %vm2686 = vweird.f32 %v2679
  %vm2687 = vmor %vm2685, %vm2686
  %v2688 = vsel %vm2687, %v2679, %v2684
  %v2689 = vrsqrt.pop %v2485
  %v2690 = vmul.f32 %v2689, %v2485
  %v2691 = vmul.f32 %v2690, %v2689
  %v2692 = vmul.f32 0.5, %v2691
  %v2693 = vsub.f32 1.5, %v2692
  %v2694 = vmul.f32 %v2689, %v2693
  %vm2695 = vweird.f32 %v2485
  %vm2696 = vweird.f32 %v2689
  %vm2697 = vmor %vm2695, %vm2696
  %v2698 = vsel %vm2697, %v2689, %v2694
  %v2699 = vrsqrt.pop %v2486
  %v2700 = vmul.f32 %v2699, %v2486
  %v2701 = vmul.f32 %v2700, %v2699
  %v2702 = vmul.f32 0.5, %v2701
  %v2703 = vsub.f32 1.5, %v2702
  %v2704 = vmul.f32 %v2699, %v2703
  %vm2705 = vweird.f32 %v2486
  %vm2706 = vweird.f32 %v2699
  %vm2707 = vmor %vm2705, %vm2706
  %v2708 = vsel %vm2707, %v2699, %v2704
  %v2709 = vrsqrt.pop %v2487
  %v2710 = vmul.f32 %v2709, %v2487
  %v2711 = vmul.f32 %v2710, %v2709
  %v2712 = vmul.f32 0.5, %v2711
  %v2713 = vsub.f32 1.5, %v2712
  %v2714 = vmul.f32 %v2709, %v2713
  %vm2715 = vweird.f32 %v2487
  %vm2716 = vweird.f32 %v2709
  %vm2717 = vmor %vm2715, %vm2716
  %v2718 = vsel %vm2717, %v2709, %v2714
  %v2719 = vrsqrt.pop %v2488
  %v2720 = vmul.f32 %v2719, %v2488
  %v2721 = vmul.f32 %v2720, %v2719
  %v2722 = vmul.f32 0.5, %v2721
  %v2723 = vsub.f32 1.5, %v2722
  %v2724 = vmul.f32 %v2719, %v2723
  %vm2725 = vweird.f32 %v2488
  %vm2726 = vweird.f32 %v2719
  %vm2727 = vmor %vm2725, %vm2726
  %v2728 = vsel %vm2727, %v2719, %v2724
  %v2729 = vmul.f32 %v2441, %v2498
  %v2730 = vmul.f32 %v2442, %v2508
  %v2731 = vmul.f32 %v2443, %v2518
  %v2732 = vmul.f32 %v2444, %v2528
  %v2733 = vmul.f32 %v2445, %v2538
  %v2734 = vmul.f32 %v2446, %v2548
  %v2735 = vmul.f32 %v2447, %v2558
  %v2736 = vmul.f32 %v2448, %v2568
  %v2737 = vmul.f32 %v2449, %v2578
  %v2738 = vmul.f32 %v2450, %v2588
  %v2739 = vmul.f32 %v2451, %v2598
  %v2740 = vmul.f32 %v2452, %v2608
  %v2741 = vmul.f32 %v2453, %v2618
  %v2742 = vmul.f32 %v2454, %v2628
  %v2743 = vmul.f32 %v2455, %v2638
  %v2744 = vmul.f32 %v2456, %v2648
  %v2745 = vmul.f32 %v2457, %v2658
  %v2746 = vmul.f32 %v2458, %v2668
  %v2747 = vmul.f32 %v2459, %v2678
  %v2748 = vmul.f32 %v2460, %v2688
  %v2749 = vmul.f32 %v2461, %v2698
  %v2750 = vmul.f32 %v2462, %v2708
  %v2751 = vmul.f32 %v2463, %v2718
  %v2752 = vmul.f32 %v2464, %v2728
  %2754 = vset.pattern.permute.xlu0 0
  %2755 = vperm.xlu0 %2754, %v2729
  %v2756 = vpop.permute.xlu0 %2755
  %2759 = vset.pattern.permute.xlu0 0
  %2760 = vperm.xlu0 %2759, %v2730
  %v2761 = vpop.permute.xlu0 %2760
  %2764 = vset.pattern.permute.xlu0 0
  %2765 = vperm.xlu0 %2764, %v2731
  %v2766 = vpop.permute.xlu0 %2765
  %2769 = vset.pattern.permute.xlu0 0
  %2770 = vperm.xlu0 %2769, %v2732
  %v2771 = vpop.permute.xlu0 %2770
  %2774 = vset.pattern.permute.xlu0 0
  %2775 = vperm.xlu0 %2774, %v2733
  %v2776 = vpop.permute.xlu0 %2775
  %2779 = vset.pattern.permute.xlu0 0
  %2780 = vperm.xlu0 %2779, %v2734
  %v2781 = vpop.permute.xlu0 %2780
  %2784 = vset.pattern.permute.xlu0 0
  %2785 = vperm.xlu0 %2784, %v2735
  %v2786 = vpop.permute.xlu0 %2785
  %2789 = vset.pattern.permute.xlu0 0
  %2790 = vperm.xlu0 %2789, %v2736
  %v2791 = vpop.permute.xlu0 %2790
  %2794 = vset.pattern.permute.xlu0 0
  %2795 = vperm.xlu0 %2794, %v2737
  %v2796 = vpop.permute.xlu0 %2795
  %2799 = vset.pattern.permute.xlu0 0
  %2800 = vperm.xlu0 %2799, %v2738
  %v2801 = vpop.permute.xlu0 %2800
  %2804 = vset.pattern.permute.xlu0 0
  %2805 = vperm.xlu0 %2804, %v2739
  %v2806 = vpop.permute.xlu0 %2805
  %2809 = vset.pattern.permute.xlu0 0
  %2810 = vperm.xlu0 %2809, %v2740
  %v2811 = vpop.permute.xlu0 %2810
  %2814 = vset.pattern.permute.xlu0 0
  %2815 = vperm.xlu0 %2814, %v2741
  %v2816 = vpop.permute.xlu0 %2815
  %2819 = vset.pattern.permute.xlu0 0
  %2820 = vperm.xlu0 %2819, %v2742
  %v2821 = vpop.permute.xlu0 %2820
  %2824 = vset.pattern.permute.xlu0 0
  %2825 = vperm.xlu0 %2824, %v2743
  %v2826 = vpop.permute.xlu0 %2825
  %2829 = vset.pattern.permute.xlu0 0
  %2830 = vperm.xlu0 %2829, %v2744
  %v2831 = vpop.permute.xlu0 %2830
  %2834 = vset.pattern.permute.xlu0 0
  %2835 = vperm.xlu0 %2834, %v2745
  %v2836 = vpop.permute.xlu0 %2835
  %2839 = vset.pattern.permute.xlu0 0
  %2840 = vperm.xlu0 %2839, %v2746
  %v2841 = vpop.permute.xlu0 %2840
  %2844 = vset.pattern.permute.xlu0 0
  %2845 = vperm.xlu0 %2844, %v2747
  %v2846 = vpop.permute.xlu0 %2845
  %2849 = vset.pattern.permute.xlu0 0
  %2850 = vperm.xlu0 %2849, %v2748
  %v2851 = vpop.permute.xlu0 %2850
  %2854 = vset.pattern.permute.xlu0 0
  %2855 = vperm.xlu0 %2854, %v2749
  %v2856 = vpop.permute.xlu0 %2855
  %2859 = vset.pattern.permute.xlu0 0
  %2860 = vperm.xlu0 %2859, %v2750
  %v2861 = vpop.permute.xlu0 %2860
  %2864 = vset.pattern.permute.xlu0 0
  %2865 = vperm.xlu0 %2864, %v2751
  %v2866 = vpop.permute.xlu0 %2865
  %2869 = vset.pattern.permute.xlu0 0
  %2870 = vperm.xlu0 %2869, %v2752
  %v2871 = vpop.permute.xlu0 %2870
  %v2873 = vmul.f32 %v2297, %v2756
  %v2874 = vmul.f32 %v2298, %v2761
  %v2875 = vmul.f32 %v2299, %v2766
  %v2876 = vmul.f32 %v2300, %v2771
  %v2877 = vmul.f32 %v2301, %v2776
  %v2878 = vmul.f32 %v2302, %v2781
  %v2879 = vmul.f32 %v2303, %v2786
  %v2880 = vmul.f32 %v2304, %v2791
  %v2881 = vmul.f32 %v2305, %v2796
  %v2882 = vmul.f32 %v2306, %v2801
  %v2883 = vmul.f32 %v2307, %v2806
  %v2884 = vmul.f32 %v2308, %v2811
  %v2885 = vmul.f32 %v2309, %v2816
  %v2886 = vmul.f32 %v2310, %v2821
  %v2887 = vmul.f32 %v2311, %v2826
  %v2888 = vmul.f32 %v2312, %v2831
  %v2889 = vmul.f32 %v2313, %v2836
  %v2890 = vmul.f32 %v2314, %v2841
  %v2891 = vmul.f32 %v2315, %v2846
  %v2892 = vmul.f32 %v2316, %v2851
  %v2893 = vmul.f32 %v2317, %v2856
  %v2894 = vmul.f32 %v2318, %v2861
  %v2895 = vmul.f32 %v2319, %v2866
  %v2896 = vmul.f32 %v2320, %v2871
  %v2897 = vld [vmem:[%s3] sm:$0xff]
  %v2898 = vld [vmem:[%s3 + $0x8] sm:$0xff]
  %v2899 = vld [vmem:[%s3 + $0x10] sm:$0xff]
  %v2900 = vld [vmem:[%s3 + $0x18] sm:$0xff]
  %v2901 = vld [vmem:[%s3 + $0x20] sm:$0xff]
  %v2902 = vld [vmem:[%s3 + $0x28] sm:$0xff]
  %v2903 = vld [vmem:[%s3 + $0x30] sm:$0xff]
  %v2904 = vld [vmem:[%s3 + $0x38] sm:$0xff]
  %v2905 = vld [vmem:[%s3 + $0x40] sm:$0xff]
  %v2906 = vld [vmem:[%s3 + $0x48] sm:$0xff]
  %v2907 = vld [vmem:[%s3 + $0x50] sm:$0xff]
  %v2908 = vld [vmem:[%s3 + $0x58] sm:$0xff]
  %v2909 = vld [vmem:[%s3 + $0x60] sm:$0xff]
  %v2910 = vld [vmem:[%s3 + $0x68] sm:$0xff]
  %v2911 = vld [vmem:[%s3 + $0x70] sm:$0xff]
  %v2912 = vld [vmem:[%s3 + $0x78] sm:$0xff]
  %v2913 = vld [vmem:[%s3 + $0x80] sm:$0xff]
  %v2914 = vld [vmem:[%s3 + $0x88] sm:$0xff]
  %v2915 = vld [vmem:[%s3 + $0x90] sm:$0xff]
  %v2916 = vld [vmem:[%s3 + $0x98] sm:$0xff]
  %v2917 = vld [vmem:[%s3 + $0xa0] sm:$0xff]
  %v2918 = vld [vmem:[%s3 + $0xa8] sm:$0xff]
  %v2919 = vld [vmem:[%s3 + $0xb0] sm:$0xff]
  %v2920 = vld [vmem:[%s3 + $0xb8] sm:$0xff]
  %2922 = vset.pattern.permute.xlu0 0
  %2923 = vperm.xlu0 %2922, %v2897
  %v2924 = vpop.permute.xlu0 %2923
  %2927 = vset.pattern.permute.xlu0 0
  %2928 = vperm.xlu0 %2927, %v2898
  %v2929 = vpop.permute.xlu0 %2928
  %2932 = vset.pattern.permute.xlu0 0
  %2933 = vperm.xlu0 %2932, %v2899
  %v2934 = vpop.permute.xlu0 %2933
  %2937 = vset.pattern.permute.xlu0 0
  %2938 = vperm.xlu0 %2937, %v2900
  %v2939 = vpop.permute.xlu0 %2938
  %2942 = vset.pattern.permute.xlu0 0
  %2943 = vperm.xlu0 %2942, %v2901
  %v2944 = vpop.permute.xlu0 %2943
  %2947 = vset.pattern.permute.xlu0 0
  %2948 = vperm.xlu0 %2947, %v2902
  %v2949 = vpop.permute.xlu0 %2948
  %2952 = vset.pattern.permute.xlu0 0
  %2953 = vperm.xlu0 %2952, %v2903
  %v2954 = vpop.permute.xlu0 %2953
  %2957 = vset.pattern.permute.xlu0 0
  %2958 = vperm.xlu0 %2957, %v2904
  %v2959 = vpop.permute.xlu0 %2958
  %2962 = vset.pattern.permute.xlu0 0
  %2963 = vperm.xlu0 %2962, %v2905
  %v2964 = vpop.permute.xlu0 %2963
  %2967 = vset.pattern.permute.xlu0 0
  %2968 = vperm.xlu0 %2967, %v2906
  %v2969 = vpop.permute.xlu0 %2968
  %2972 = vset.pattern.permute.xlu0 0
  %2973 = vperm.xlu0 %2972, %v2907
  %v2974 = vpop.permute.xlu0 %2973
  %2977 = vset.pattern.permute.xlu0 0
  %2978 = vperm.xlu0 %2977, %v2908
  %v2979 = vpop.permute.xlu0 %2978
  %2982 = vset.pattern.permute.xlu0 0
  %2983 = vperm.xlu0 %2982, %v2909
  %v2984 = vpop.permute.xlu0 %2983
  %2987 = vset.pattern.permute.xlu0 0
  %2988 = vperm.xlu0 %2987, %v2910
  %v2989 = vpop.permute.xlu0 %2988
  %2992 = vset.pattern.permute.xlu0 0
  %2993 = vperm.xlu0 %2992, %v2911
  %v2994 = vpop.permute.xlu0 %2993
  %2997 = vset.pattern.permute.xlu0 0
  %2998 = vperm.xlu0 %2997, %v2912
  %v2999 = vpop.permute.xlu0 %2998
  %3002 = vset.pattern.permute.xlu0 0
  %3003 = vperm.xlu0 %3002, %v2913
  %v3004 = vpop.permute.xlu0 %3003
  %3007 = vset.pattern.permute.xlu0 0
  %3008 = vperm.xlu0 %3007, %v2914
  %v3009 = vpop.permute.xlu0 %3008
  %3012 = vset.pattern.permute.xlu0 0
  %3013 = vperm.xlu0 %3012, %v2915
  %v3014 = vpop.permute.xlu0 %3013
  %3017 = vset.pattern.permute.xlu0 0
  %3018 = vperm.xlu0 %3017, %v2916
  %v3019 = vpop.permute.xlu0 %3018
  %3022 = vset.pattern.permute.xlu0 0
  %3023 = vperm.xlu0 %3022, %v2917
  %v3024 = vpop.permute.xlu0 %3023
  %3027 = vset.pattern.permute.xlu0 0
  %3028 = vperm.xlu0 %3027, %v2918
  %v3029 = vpop.permute.xlu0 %3028
  %3032 = vset.pattern.permute.xlu0 0
  %3033 = vperm.xlu0 %3032, %v2919
  %v3034 = vpop.permute.xlu0 %3033
  %3037 = vset.pattern.permute.xlu0 0
  %3038 = vperm.xlu0 %3037, %v2920
  %v3039 = vpop.permute.xlu0 %3038
  %v3041 = vadd.f32 %v2873, %v2924
  %v3042 = vadd.f32 %v2874, %v2929
  %v3043 = vadd.f32 %v2875, %v2934
  %v3044 = vadd.f32 %v2876, %v2939
  %v3045 = vadd.f32 %v2877, %v2944
  %v3046 = vadd.f32 %v2878, %v2949
  %v3047 = vadd.f32 %v2879, %v2954
  %v3048 = vadd.f32 %v2880, %v2959
  %v3049 = vadd.f32 %v2881, %v2964
  %v3050 = vadd.f32 %v2882, %v2969
  %v3051 = vadd.f32 %v2883, %v2974
  %v3052 = vadd.f32 %v2884, %v2979
  %v3053 = vadd.f32 %v2885, %v2984
  %v3054 = vadd.f32 %v2886, %v2989
  %v3055 = vadd.f32 %v2887, %v2994
  %v3056 = vadd.f32 %v2888, %v2999
  %v3057 = vadd.f32 %v2889, %v3004
  %v3058 = vadd.f32 %v2890, %v3009
  %v3059 = vadd.f32 %v2891, %v3014
  %v3060 = vadd.f32 %v2892, %v3019
  %v3061 = vadd.f32 %v2893, %v3024
  %v3062 = vadd.f32 %v2894, %v3029
  %v3063 = vadd.f32 %v2895, %v3034
  %v3064 = vadd.f32 %v2896, %v3039
  %v3065 = vmax.f32 %v3041, 0.0
  %v3066 = vmax.f32 %v3042, 0.0
  %v3067 = vmax.f32 %v3043, 0.0
  %v3068 = vmax.f32 %v3044, 0.0
  %v3069 = vmax.f32 %v3045, 0.0
  %v3070 = vmax.f32 %v3046, 0.0
  %v3071 = vmax.f32 %v3047, 0.0
  %v3072 = vmax.f32 %v3048, 0.0
  %v3073 = vmax.f32 %v3049, 0.0
  %v3074 = vmax.f32 %v3050, 0.0
  %v3075 = vmax.f32 %v3051, 0.0
  %v3076 = vmax.f32 %v3052, 0.0
  %v3077 = vmax.f32 %v3053, 0.0
  %v3078 = vmax.f32 %v3054, 0.0
  %v3079 = vmax.f32 %v3055, 0.0
  %v3080 = vmax.f32 %v3056, 0.0
  %v3081 = vmax.f32 %v3057, 0.0
  %v3082 = vmax.f32 %v3058, 0.0
  %v3083 = vmax.f32 %v3059, 0.0
  %v3084 = vmax.f32 %v3060, 0.0
  %v3085 = vmax.f32 %v3061, 0.0
  %v3086 = vmax.f32 %v3062, 0.0
  %v3087 = vmax.f32 %v3063, 0.0
  %v3088 = vmax.f32 %v3064, 0.0
  %3089 = vst.msk [vmem:[%s4] sm:$0xff] %vm2200, %v3065
  %3090 = vst.msk [vmem:[%s4 + $0x8] sm:$0xff] %vm2200, %v3066
  %3091 = vst.msk [vmem:[%s4 + $0x10] sm:$0xff] %vm2200, %v3067
  %3092 = vst.msk [vmem:[%s4 + $0x18] sm:$0xff] %vm2200, %v3068
  %3093 = vst.msk [vmem:[%s4 + $0x20] sm:$0xff] %vm2200, %v3069
  %3094 = vst.msk [vmem:[%s4 + $0x28] sm:$0xff] %vm2200, %v3070
  %3095 = vst.msk [vmem:[%s4 + $0x30] sm:$0xff] %vm2200, %v3071
  %3096 = vst.msk [vmem:[%s4 + $0x38] sm:$0xff] %vm2200, %v3072
  %3097 = vst.msk [vmem:[%s4 + $0x40] sm:$0xff] %vm2200, %v3073
  %3098 = vst.msk [vmem:[%s4 + $0x48] sm:$0xff] %vm2200, %v3074
  %3099 = vst.msk [vmem:[%s4 + $0x50] sm:$0xff] %vm2200, %v3075
  %3100 = vst.msk [vmem:[%s4 + $0x58] sm:$0xff] %vm2200, %v3076
  %3101 = vst.msk [vmem:[%s4 + $0x60] sm:$0xff] %vm2200, %v3077
  %3102 = vst.msk [vmem:[%s4 + $0x68] sm:$0xff] %vm2200, %v3078
  %3103 = vst.msk [vmem:[%s4 + $0x70] sm:$0xff] %vm2200, %v3079
  %3104 = vst.msk [vmem:[%s4 + $0x78] sm:$0xff] %vm2200, %v3080
  %3105 = vst.msk [vmem:[%s4 + $0x80] sm:$0xff] %vm2200, %v3081
  %3106 = vst.msk [vmem:[%s4 + $0x88] sm:$0xff] %vm2200, %v3082
  %3107 = vst.msk [vmem:[%s4 + $0x90] sm:$0xff] %vm2200, %v3083
  %3108 = vst.msk [vmem:[%s4 + $0x98] sm:$0xff] %vm2200, %v3084
  %3109 = vst.msk [vmem:[%s4 + $0xa0] sm:$0xff] %vm2200, %v3085
  %3110 = vst.msk [vmem:[%s4 + $0xa8] sm:$0xff] %vm2200, %v3086
  %3111 = vst.msk [vmem:[%s4 + $0xb0] sm:$0xff] %vm2200, %v3087
  %3112 = vst.msk [vmem:[%s4 + $0xb8] sm:$0xff] %vm2200, %v3088
  // Predicated region
  $region18: #{fused_relu_conv_bn_relu.1} parent=0 // pred_check
    _
  $region19: #{fused_relu_conv_bn_relu.1} parent=0 // pred_check_branch
    %3114 = sbr.rel (0) target = $region21
  $region20: #{fused_relu_conv_bn_relu.1} parent=0 // pred_region
    _
  $region21: #{fused_relu_conv_bn_relu.1} parent=0 // pred_fallthru
    _
  // Predicated region
  $region22: #{fused_relu_conv_bn_relu.1} parent=0 // pred_check
    _
  $region23: #{fused_relu_conv_bn_relu.1} parent=0 // pred_check_branch
    %3116 = sbr.rel (0) target = $region25
  $region24: #{fused_relu_conv_bn_relu.1} parent=0 // pred_region
    _
  $region25: #{fused_relu_conv_bn_relu.1} parent=0 // pred_fallthru
    _

</llo_original>
